<compile_context>
chip_gen: v5e
topology: v5e:2x2
jax: 0.10.0
libtpu: 0.0.40
codegen_flags: <defaults>
</compile_context>

<pallas_src>
import functools

import jax
import jax.numpy as jnp
from jax import lax
from jax.experimental import pallas as pl
from jax.experimental.pallas import tpu as pltpu


# --------------------------------------------------------------------------
# small helpers
# --------------------------------------------------------------------------
def _round_up(x, m):
    return ((x + m - 1) // m) * m


def _pad_axis(x, axis, target):
    if x.shape[axis] == target:
        return x
    widths = [(0, 0)] * x.ndim
    widths[axis] = (0, target - x.shape[axis])
    return jnp.pad(x, widths)


def _vmem_budget():
    """(per-step working-set budget, vmem_limit cap) -- generation aware."""
    cap = 128 * 1024 * 1024
    try:
        cap = int(pltpu.get_tpu_info().vmem_capacity_bytes)
    except Exception:
        pass
    if cap <= 96 * 1024 * 1024:        # v7x-class parts: 64 MiB VMEM per core
        return 20 << 20, 32 << 20
    return 32 << 20, 64 << 20          # v5e / v6e: 128 MiB physical VMEM


def _footprint(tb, tq, tk, n_head, d_k, d_v, in_bytes, out_bytes,
               has_mask, write_attn, attn_bytes):
    """Conservative per-step VMEM estimate: double-buffered pipeline blocks +
    persistent accumulator scratch + in-kernel f32 score/exp intermediates."""
    lane = lambda n: max(_round_up(n, 128), 128)
    sub = lambda n: max(_round_up(n, 8), 8)
    blk = tb * sub(tq) * lane(n_head * d_k) * in_bytes            # q tile
    blk += tb * sub(tk) * lane(n_head * d_k) * in_bytes           # k tile
    blk += tb * sub(tk) * lane(n_head * d_v) * in_bytes           # v tile
    if has_mask:
        blk += tb * sub(tq) * lane(tk) * 1                        # int8 mask tile
    blk += tb * sub(tq) * lane(n_head * d_v) * out_bytes          # out tile
    if write_attn:
        blk += tb * sub(tq) * lane(tk) * attn_bytes               # attn tile
    total = 2 * blk                                               # double buffering
    total += 2 * n_head * tb * sub(tq) * 128 * 4                  # m, l scratch
    total += n_head * tb * sub(tq) * lane(d_v) * 4                # acc scratch
    total += 4 * tb * sub(tq) * lane(tk) * 4                      # score/exp temps
    return total


def _choose_tiles(B, Lq, Lk, n_head, d_k, d_v, in_bytes, out_bytes,
                  has_mask, write_attn, attn_bytes, budget, max_key_block=None):
    sub_mult = 8 if in_bytes >= 4 else 16          # bf16/fp16 sublane packing
    Lq8 = _round_up(max(Lq, 1), sub_mult)
    Lk128 = _round_up(max(Lk, 1), 128)             # lane/MXU-aligned key length

    def fits(tb, tq, tk):
        return _footprint(tb, tq, tk, n_head, d_k, d_v, in_bytes, out_bytes,
                          has_mask, write_attn, attn_bytes) <= budget

    if write_attn:
        tk_cands = [Lk128]                         # exact attn writeback: 1 key step
    else:
        tk_cands = [Lk128] + [t for t in (2048, 1024, 512, 256, 128) if t < Lk128]
        if max_key_block is not None:
            tk_cands = [t for t in tk_cands if t <= max(128, max_key_block)] or [128]

    tq_set = {t for t in (512, 256, 128, 64, 32, 16, 8)
              if sub_mult <= t <= Lq8 and t % sub_mult == 0}
    if Lq8 <= 512:
        tq_set.add(Lq8)
    tq_cands = sorted(tq_set, reverse=True)

    # Prefer a large q tile (fills the MXU M dimension) before anything else,
    # then the largest key tile that keeps the working set inside the budget.
    tq, tk = tq_cands[-1], tk_cands[-1]
    done = False
    for cand_tq in tq_cands:
        for cand_tk in tk_cands:
            if fits(1, cand_tq, cand_tk):
                tq, tk = cand_tq, cand_tk
                done = True
                break
        if done:
            break

    Lq_p = _round_up(Lq, tq)
    Lk_p = _round_up(Lk, tk)
    nq = Lq_p // tq

    # Grow the batch block only while it fits and (for dual-TensorCore parts)
    # the parallel part of the grid keeps at least two steps.
    tb = 1
    for cand in sorted((d for d in range(2, B + 1) if B % d == 0), reverse=True):
        if (B // cand) * nq < 2 and B * nq >= 2:
            continue
        if fits(cand, tq, tk):
            tb = cand
            break

    fp = _footprint(tb, tq, tk, n_head, d_k, d_v, in_bytes, out_bytes,
                    has_mask, write_attn, attn_bytes)
    return tb, tq, tk, Lq_p, Lk_p, fp


# --------------------------------------------------------------------------
# Pallas kernel: fused (multi-head) scaled dot-product attention
# --------------------------------------------------------------------------
def _attn_kernel(*refs, n_head, d_k, d_v, scale, has_mask, write_attn,
                 kv_len, blk_k, need_kpad_mask, compute_dtype):
    """One (batch-block, q-tile) block; the key axis (grid dim 2) is the
    innermost reduction axis with online-softmax accumulators in VMEM."""
    it = iter(refs)
    q_ref = next(it)
    k_ref = next(it)
    v_ref = next(it)
    mask_ref = next(it) if has_mask else None
    out_ref = next(it)
    attn_ref = next(it) if write_attn else None
    m_sc = next(it)        # (n_head, TB, tq, 1)  running max
    l_sc = next(it)        # (n_head, TB, tq, 1)  running sum
    acc_sc = next(it)      # (n_head, TB, tq, d_v) running output

    ki = pl.program_id(2)
    nk = pl.num_programs(2)

    @pl.when(ki == 0)
    def _():
        m_sc[...] = jnp.full_like(m_sc, -jnp.inf)
        l_sc[...] = jnp.zeros_like(l_sc)
        acc_sc[...] = jnp.zeros_like(acc_sc)

    # Fold the softmax temperature into q (tq * n_head*d_k elements once,
    # instead of scaling the tq*tk score tile per head).
    q = q_ref[...] * scale             # (TB, tq, n_head*d_k)
    k = k_ref[...]                     # (TB, tk, n_head*d_k)
    v = v_ref[...]                     # (TB, tk, n_head*d_v)
    if compute_dtype is not None:      # optional bf16 MXU fast path (v6e/v7x)
        q = q.astype(compute_dtype)
        k = k.astype(compute_dtype)
        v = v.astype(compute_dtype)

    neg_mask = None
    if has_mask:
        neg_mask = mask_ref[...] != 0               # int8 -> bool, no i32 widening

    kvalid = None
    if need_kpad_mask:
        kpos = ki * blk_k + lax.broadcasted_iota(
            jnp.int32, (q.shape[0], q.shape[1], blk_k), 2)
        kvalid = kpos < kv_len

    for h in range(n_head):
        q_h = q[:, :, h * d_k:(h + 1) * d_k]        # (TB, tq, d_k)
        k_h = k[:, :, h * d_k:(h + 1) * d_k]        # (TB, tk, d_k)
        v_h = v[:, :, h * d_v:(h + 1) * d_v]        # (TB, tk, d_v)

        # Q @ K^T without an explicit transpose: contract the shared last dim.
        s = lax.dot_general(
            q_h, k_h,
            dimension_numbers=(((2,), (2,)), ((0,), (0,))),
            preferred_element_type=jnp.float32)      # (TB, tq, tk) f32
        if has_mask:
            s = jnp.where(neg_mask, jnp.float32(-10000000000.0), s)
        if need_kpad_mask:
            s = jnp.where(kvalid, s, jnp.float32(-1e30))

        # Online-softmax update (exact softmax when there is one key step).
        m_prev = m_sc[h]
        m_new = jnp.maximum(m_prev, jnp.max(s, axis=-1, keepdims=True))
        alpha = jnp.exp(m_prev - m_new)
        p = jnp.exp(s - m_new)
        l_new = alpha * l_sc[h] + jnp.sum(p, axis=-1, keepdims=True)
        pv = lax.dot_general(
            p.astype(v_h.dtype), v_h,
            dimension_numbers=(((2,), (1,)), ((0,), (0,))),
            preferred_element_type=jnp.float32)      # (TB, tq, d_v)
        acc_sc[h] = alpha * acc_sc[h] + pv
        m_sc[h] = m_new
        l_sc[h] = l_new

        if write_attn:
            # write_attn implies a single key step and n_head == 1 (enforced by
            # the wrapper), so p is already the full softmax numerator.
            r = pl.reciprocal(l_new, approx=True)
            r = r * (2.0 - l_new * r)                # one Newton step, ~f32 accurate
            attn_ref[...] = (p * r).astype(attn_ref.dtype)

    # TODO(synk): nn.Dropout(0.1) on the attention weights is identity in eval
    # mode; training-mode (torch RNG) dropout is not reproduced here.

    @pl.when(ki == nk - 1)
    def _():
        for h in range(n_head):
            l = l_sc[h]
            r = pl.reciprocal(l, approx=True)
            r = r * (2.0 - l * r)
            out_ref[:, :, h * d_v:(h + 1) * d_v] = (
                acc_sc[h] * r).astype(out_ref.dtype)


# --------------------------------------------------------------------------
# Attention core wrapper (shared by the SDPA module and the fused MHA path)
# --------------------------------------------------------------------------
def _attention_core(q, k, v, *, n_head, d_k, d_v, temperature, mask=None,
                    return_attn=False, compute_dtype=None, max_key_block=None):
    """q: (B, Lq, n_head*d_k), k: (B, Lk, n_head*d_k), v: (B, Lk, n_head*d_v),
    mask: optional (B, Lq, Lk) (True / nonzero == masked out, shared across
    heads). Returns (out, attn): out (B, Lq, n_head*d_v) head-major last dim,
    attn (B, Lq, Lk) in the input dtype or None."""
    B, Lq, dq = q.shape
    Lk = k.shape[1]
    assert dq == n_head * d_k and v.shape[-1] == n_head * d_v
    assert k.shape[0] == B and v.shape[0] == B and v.shape[1] == Lk
    assert not (return_attn and n_head != 1), (
        "attn writeback is only supported through the per-head (n_head=1) API")

    has_mask = mask is not None
    attn_dtype = q.dtype
    in_bytes = q.dtype.itemsize
    budget, limit_cap = _vmem_budget()

    TB, tq, tk, Lq_p, Lk_p, fp = _choose_tiles(
        B, Lq, Lk, n_head, d_k, d_v, in_bytes=in_bytes, out_bytes=in_bytes,
        has_mask=has_mask, write_attn=return_attn,
        attn_bytes=jnp.dtype(attn_dtype).itemsize, budget=budget,
        max_key_block=max_key_block)

    # Pad sequence dims so every block is full.  Padded keys are invalidated
    # in-kernel (iota mask); padded query rows are sliced off below.
    q_p = _pad_axis(q, 1, Lq_p)
    k_p = _pad_axis(k, 1, Lk_p)
    v_p = _pad_axis(v, 1, Lk_p)

    args = [q_p, k_p, v_p]
    in_specs = [
        pl.BlockSpec((TB, tq, n_head * d_k), lambda b, qi, ki: (b, qi, 0)),
        pl.BlockSpec((TB, tk, n_head * d_k), lambda b, qi, ki: (b, ki, 0)),
        pl.BlockSpec((TB, tk, n_head * d_v), lambda b, qi, ki: (b, ki, 0)),
    ]
    if has_mask:
        m8 = mask if mask.dtype == jnp.int8 else mask.astype(jnp.int8)
        m8 = _pad_axis(_pad_axis(m8, 1, Lq_p), 2, Lk_p)   # 1-byte mask stream
        args.append(m8)
        in_specs.append(pl.BlockSpec((TB, tq, tk), lambda b, qi, ki: (b, qi, ki)))

    out_shapes = [jax.ShapeDtypeStruct((B, Lq_p, n_head * d_v), q.dtype)]
    out_specs = [pl.BlockSpec((TB, tq, n_head * d_v), lambda b, qi, ki: (b, qi, 0))]
    if return_attn:
        out_shapes.append(jax.ShapeDtypeStruct((B, Lq_p, Lk_p), attn_dtype))
        out_specs.append(pl.BlockSpec((TB, tq, tk), lambda b, qi, ki: (b, qi, ki)))

    grid = (B // TB, Lq_p // tq, Lk_p // tk)
    vmem_limit = int(min(max(fp + (6 << 20), 16 << 20), limit_cap))

    kernel = functools.partial(
        _attn_kernel, n_head=n_head, d_k=d_k, d_v=d_v,
        scale=float(1.0 / float(temperature)), has_mask=has_mask,
        write_attn=return_attn, kv_len=Lk, blk_k=tk,
        need_kpad_mask=(Lk_p != Lk), compute_dtype=compute_dtype)

    outs = pl.pallas_call(
        kernel,
        out_shape=tuple(out_shapes),
        grid_spec=pltpu.PrefetchScalarGridSpec(
            num_scalar_prefetch=0,
            grid=grid,
            in_specs=in_specs,
            out_specs=out_specs,
            scratch_shapes=[
                pltpu.VMEM((n_head, TB, tq, 1), jnp.float32),    # running max
                pltpu.VMEM((n_head, TB, tq, 1), jnp.float32),    # running sum
                pltpu.VMEM((n_head, TB, tq, d_v), jnp.float32),  # running output
            ]),
        compiler_params=pltpu.CompilerParams(
            dimension_semantics=("parallel", "parallel", "arbitrary"),
            vmem_limit_bytes=vmem_limit),
    )(*args)

    out = outs[0][:, :Lq, :]
    attn = outs[1][:, :Lq, :Lk] if return_attn else None
    return out, attn


def scaled_dot_product_attention(q, k, v, temperature, mask=None, return_attn=True,
                                 compute_dtype=None):
    """Pallas ScaledDotProductAttention.forward (eval mode).

    q: (B, Lq, D), k: (B, Lk, D), v: (B, Lk, Dv).  Returns (output, attn);
    attn is None when return_attn=False (skips the O(B*Lq*Lk) HBM writeback)."""
    return _attention_core(
        q, k, v, n_head=1, d_k=q.shape[-1], d_v=v.shape[-1],
        temperature=float(temperature), mask=mask, return_attn=return_attn,
        compute_dtype=compute_dtype)


# --------------------------------------------------------------------------
# MultiHeadAttention forward (eval mode), attention core fused in Pallas
# --------------------------------------------------------------------------
def _layer_norm(x, gamma, beta, eps=1e-5):
    mu = jnp.mean(x, axis=-1, keepdims=True)
    var = jnp.mean((x - mu) ** 2, axis=-1, keepdims=True)
    return (x - mu) * lax.rsqrt(var + eps) * gamma + beta


def init_mha_params(key, n_head, d_model, d_k, d_v):
    k1, k2, k3, k4 = jax.random.split(key, 4)
    std_qk = (2.0 / (d_model + d_k)) ** 0.5
    std_v = (2.0 / (d_model + d_v)) ** 0.5
    std_fc = (2.0 / (n_head * d_v + d_model)) ** 0.5   # xavier normal
    # Weights stored as (in, out): y = x @ W  (same math as torch's x @ W.T).
    return dict(
        n_head=n_head, d_k=d_k, d_v=d_v,
        w_qs=std_qk * jax.random.normal(k1, (d_model, n_head * d_k), jnp.float32),
        w_ks=std_qk * jax.random.normal(k2, (d_model, n_head * d_k), jnp.float32),
        w_vs=std_v * jax.random.normal(k3, (d_model, n_head * d_v), jnp.float32),
        fc_w=std_fc * jax.random.normal(k4, (n_head * d_v, d_model), jnp.float32),
        fc_b=jnp.zeros((d_model,), jnp.float32),
        ln_g=jnp.ones((d_model,), jnp.float32),
        ln_b=jnp.zeros((d_model,), jnp.float32),
    )


def multi_head_attention(params, q, k, v, k_=None, mask=None, compute_dtype=None):
    """Mirror of MultiHeadAttention.forward (eval mode: dropouts are identity)."""
    n_head, d_k, d_v = params["n_head"], params["d_k"], params["d_v"]
    sz_b, len_q, _ = q.shape
    residual = q
    temperature = float(d_k) ** 0.5

    # Head projections stay packed as (sz_b, L, n_head*d): the kernel folds the
    # head axis internally, so torch's four split-head permute/contiguous HBM
    # round trips disappear and the kernel writes one lane-dense
    # (sz_b, len_q, n_head*d_v) output slab.
    qp = q @ params["w_qs"]
    kp = k @ params["w_ks"]
    vp = v @ params["w_vs"]

    if mask is not None and mask.shape[0] == n_head * sz_b:
        mask = mask[:sz_b]   # torch-style head-replicated mask -> one shared copy

    out, _ = _attention_core(
        qp, kp, vp, n_head=n_head, d_k=d_k, d_v=d_v, temperature=temperature,
        mask=mask, return_attn=False, compute_dtype=compute_dtype)
    # out layout == torch's output.permute(1, 2, 0, 3).view(sz_b, len_q, -1).

    if k_ is not None:
        # Self-loop subtraction: with a single key per query, softmax over the
        # size-1 key axis is identically 1 (masked or not) and dropout is
        # identity in eval mode, so that attention output equals the projected
        # value -- computed exactly without a degenerate kernel launch.
        v_ = (k_ @ params["w_vs"]).reshape(sz_b, len_q, -1)
        out = out - v_

    out = out @ params["fc_w"] + params["fc_b"]
    # TODO(synk): nn.Dropout(0.1) after fc is identity in eval mode.
    out = _layer_norm(out + residual, params["ln_g"], params["ln_b"])
    return out


# --------------------------------------------------------------------------
# Pure-JAX references
# --------------------------------------------------------------------------
def _sdpa_reference(q, k, v, temperature, mask=None):
    attn = jnp.einsum("bqd,bkd->bqk", q, k) / temperature
    if mask is not None:
        attn = jnp.where(mask, -10000000000.0, attn)
    attn = jax.nn.softmax(attn, axis=-1)
    out = jnp.einsum("bqk,bkd->bqd", attn, v)
    return out, attn


def _mha_reference(params, q, k, v, k_=None, mask=None):
    n_head, d_k, d_v = params["n_head"], params["d_k"], params["d_v"]
    sz_b, len_q, _ = q.shape
    len_k = k.shape[1]
    len_v = v.shape[1]
    residual = q
    temperature = float(d_k) ** 0.5

    head_mask = None
    if mask is not None:
        head_mask = mask if mask.shape[0] == n_head * sz_b else jnp.tile(mask, (n_head, 1, 1))

    qh = (q @ params["w_qs"]).reshape(sz_b, len_q, n_head, d_k)
    kh = (k @ params["w_ks"]).reshape(sz_b, len_k, n_head, d_k)
    vh = (v @ params["w_vs"]).reshape(sz_b, len_v, n_head, d_v)
    qh = qh.transpose(2, 0, 1, 3).reshape(-1, len_q, d_k)
    kh = kh.transpose(2, 0, 1, 3).reshape(-1, len_k, d_k)
    vh = vh.transpose(2, 0, 1, 3).reshape(-1, len_v, d_v)
    out, _ = _sdpa_reference(qh, kh, vh, temperature, mask=head_mask)
    out = out.reshape(n_head, sz_b, len_q, d_v).transpose(1, 2, 0, 3)
    out = out.reshape(sz_b, len_q, -1)

    if k_ is not None:
        q_ = (k_ @ params["w_qs"]).reshape(sz_b, 1, n_head, d_k).transpose(2, 0, 1, 3).reshape(-1, 1, d_k)
        k2 = (k_ @ params["w_ks"]).reshape(sz_b, 1, n_head, d_k).transpose(2, 0, 1, 3).reshape(-1, 1, d_k)
        v2 = (k_ @ params["w_vs"]).reshape(sz_b, 1, n_head, d_v).transpose(2, 0, 1, 3).reshape(-1, 1, d_v)
        tmp, _ = _sdpa_reference(q_, k2, v2, temperature, mask=None)
        tmp = tmp.reshape(n_head, sz_b, 1, d_v).transpose(1, 2, 0, 3).reshape(sz_b, len_q, -1)
        out = out - tmp

    out = out @ params["fc_w"] + params["fc_b"]
    out = _layer_norm(out + residual, params["ln_g"], params["ln_b"])
    return out


# --------------------------------------------------------------------------
if __name__ == "__main__":
    key = jax.random.PRNGKey(0)
    kq, kk, kv, km, kp, kx, kf1, kf2, kf3, kmm = jax.random.split(key, 10)

    # ---- Standalone ScaledDotProductAttention kernel checks ----
    B, Lq, Lk, D, Dv = 8, 8, 8, 32, 32
    temperature = float(D) ** 0.5
    q = jax.random.normal(kq, (B, Lq, D), dtype=jnp.float32)
    k = jax.random.normal(kk, (B, Lk, D), dtype=jnp.float32)
    v = jax.random.normal(kv, (B, Lk, Dv), dtype=jnp.float32)
    mask = jax.random.bernoulli(km, 0.2, (B, Lq, Lk))

    out, attn = scaled_dot_product_attention(q, k, v, temperature, mask=None,
                                             return_attn=True)
    jax.block_until_ready((out, attn))
    out_r, attn_r = _sdpa_reference(q, k, v, temperature, mask=None)
    assert jnp.allclose(out, out_r, atol=1e-5, rtol=1e-5)
    assert jnp.allclose(attn, attn_r, atol=1e-5, rtol=1e-5)

    out_m, attn_m = scaled_dot_product_attention(q, k, v, temperature, mask=mask,
                                                 return_attn=True)
    jax.block_until_ready((out_m, attn_m))
    out_mr, attn_mr = _sdpa_reference(q, k, v, temperature, mask=mask)
    assert jnp.allclose(out_m, out_mr, atol=1e-5, rtol=1e-5)
    assert jnp.allclose(attn_m, attn_mr, atol=1e-5, rtol=1e-5)

    # ---- Multi-step key axis (online-softmax / flash path) ----
    Bf, Lqf, Lkf, Df = 4, 64, 256, 32
    qf = jax.random.normal(kf1, (Bf, Lqf, Df), dtype=jnp.float32)
    kf = jax.random.normal(kf2, (Bf, Lkf, Df), dtype=jnp.float32)
    vf = jax.random.normal(kf3, (Bf, Lkf, Df), dtype=jnp.float32)
    maskf = jax.random.bernoulli(kmm, 0.3, (Bf, Lqf, Lkf))
    out_f, _ = _attention_core(qf, kf, vf, n_head=1, d_k=Df, d_v=Df,
                               temperature=float(Df) ** 0.5, mask=maskf,
                               return_attn=False, max_key_block=128)
    jax.block_until_ready(out_f)
    out_fr, _ = _sdpa_reference(qf, kf, vf, float(Df) ** 0.5, mask=maskf)
    assert jnp.allclose(out_f, out_fr, atol=1e-4, rtol=1e-4)

    # ---- MultiHeadAttention forward (eval mode) ----
    n_head, d_model, d_k, d_v = 4, 32, 16, 16
    sz_b, seq = 2, 8
    params = init_mha_params(kp, n_head, d_model, d_k, d_v)
    x = jax.random.normal(kx, (sz_b, seq, d_model), dtype=jnp.float32)

    out_mha = multi_head_attention(params, x, x, x)
    jax.block_until_ready(out_mha)
    ref_mha = _mha_reference(params, x, x, x)
    assert jnp.allclose(out_mha, ref_mha, atol=1e-4, rtol=1e-4)

    mha_mask = jax.random.bernoulli(kmm, 0.25, (sz_b, seq, seq))
    out_mham = multi_head_attention(params, x, x, x, mask=mha_mask)
    jax.block_until_ready(out_mham)
    ref_mham = _mha_reference(params, x, x, x, mask=mha_mask)
    assert jnp.allclose(out_mham, ref_mham, atol=1e-4, rtol=1e-4)

    # ---- MHA with the self-loop subtraction path (len_q == 1, as in TGAT) ----
    q1 = x[:, :1, :]
    k_self = x[:, :1, :]
    out_sl = multi_head_attention(params, q1, x, x, k_=k_self)
    jax.block_until_ready(out_sl)
    ref_sl = _mha_reference(params, q1, x, x, k_=k_self)
    assert jnp.allclose(out_sl, ref_sl, atol=1e-4, rtol=1e-4)

    # ---- Larger MHA with a lane-dense (n_head*d_v == 128) output slab ----
    n_head2, d_model2, d_k2, d_v2 = 4, 128, 32, 32
    sz_b2, seq2 = 4, 128
    params2 = init_mha_params(kf2, n_head2, d_model2, d_k2, d_v2)
    x2 = jax.random.normal(kf3, (sz_b2, seq2, d_model2), dtype=jnp.float32)
    out2 = multi_head_attention(params2, x2, x2, x2)
    jax.block_until_ready(out2)
    ref2 = _mha_reference(params2, x2, x2, x2)
    assert jnp.allclose(out2, ref2, atol=2e-4, rtol=2e-4)

    print("KERNEL_OK")
</pallas_src>

<mosaic_0001>
module attributes {stable_mosaic.version = 11 : i64} {
  func.func @_attn_kernel(%arg0: i32, %arg1: i32, %arg2: i32, %arg3: memref<4x8x32xf32, #tpu.memory_space<vmem>>, %arg4: memref<4x128x32xf32, #tpu.memory_space<vmem>>, %arg5: memref<4x128x32xf32, #tpu.memory_space<vmem>>, %arg6: memref<4x8x32xf32, #tpu.memory_space<vmem>>, %arg7: memref<4x8x128xf32, #tpu.memory_space<vmem>>, %arg8: memref<1x4x8x1xf32, #tpu.memory_space<vmem>>, %arg9: memref<1x4x8x1xf32, #tpu.memory_space<vmem>>, %arg10: memref<1x4x8x32xf32, #tpu.memory_space<vmem>>) attributes {dimension_semantics = [#tpu.dimension_semantics<parallel>, #tpu.dimension_semantics<parallel>, #tpu.dimension_semantics<arbitrary>], iteration_bounds = array<i64: 2, 1, 1>, scalar_prefetch = 0 : i64, scratch_operands = 3 : i64, tpu.core_type = #tpu.core_type<tc>, window_params = [{transform_indices = @transform_0, window_bounds = array<i64: 4, 8, 32>}, {transform_indices = @transform_1, window_bounds = array<i64: 4, 128, 32>}, {transform_indices = @transform_2, window_bounds = array<i64: 4, 128, 32>}, {transform_indices = @transform_3, window_bounds = array<i64: 4, 8, 32>}, {transform_indices = @transform_4, window_bounds = array<i64: 4, 8, 128>}]} {
    %c0_i32 = arith.constant 0 : i32
    %0 = arith.cmpi eq, %arg2, %c0_i32 : i32
    %1 = arith.extui %0 : i1 to i32
    %c0_i32_0 = arith.constant 0 : i32
    %2 = arith.cmpi ne, %1, %c0_i32_0 : i32
    scf.if %2 {
      %cst_44 = arith.constant 0xFF800000 : f32
      %59 = vector.broadcast %cst_44 : f32 to vector<1x4x8x1xf32>
      %c0_45 = arith.constant 0 : index
      %c0_46 = arith.constant 0 : index
      %c0_47 = arith.constant 0 : index
      %c0_48 = arith.constant 0 : index
      %60 = vector.load %arg8[%c0_45, %c0_46, %c0_47, %c0_48] : memref<1x4x8x1xf32, #tpu.memory_space<vmem>>, vector<1x4x8x1xf32>
      tpu.vector_store %arg8[%c0_45, %c0_46, %c0_47, %c0_48], %59 {strides = array<i32>} : memref<1x4x8x1xf32, #tpu.memory_space<vmem>>, vector<1x4x8x1xf32>,
      %cst_49 = arith.constant 0.000000e+00 : f32
      %61 = vector.broadcast %cst_49 : f32 to vector<1x4x8x1xf32>
      %c0_50 = arith.constant 0 : index
      %c0_51 = arith.constant 0 : index
      %c0_52 = arith.constant 0 : index
      %c0_53 = arith.constant 0 : index
      %62 = vector.load %arg9[%c0_50, %c0_51, %c0_52, %c0_53] : memref<1x4x8x1xf32, #tpu.memory_space<vmem>>, vector<1x4x8x1xf32>
      tpu.vector_store %arg9[%c0_50, %c0_51, %c0_52, %c0_53], %61 {strides = array<i32>} : memref<1x4x8x1xf32, #tpu.memory_space<vmem>>, vector<1x4x8x1xf32>,
      %cst_54 = arith.constant 0.000000e+00 : f32
      %63 = vector.broadcast %cst_54 : f32 to vector<1x4x8x32xf32>
      %c0_55 = arith.constant 0 : index
      %c0_56 = arith.constant 0 : index
      %c0_57 = arith.constant 0 : index
      %c0_58 = arith.constant 0 : index
      %64 = vector.load %arg10[%c0_55, %c0_56, %c0_57, %c0_58] : memref<1x4x8x32xf32, #tpu.memory_space<vmem>>, vector<1x4x8x32xf32>
      tpu.vector_store %arg10[%c0_55, %c0_56, %c0_57, %c0_58], %63 {strides = array<i32>} : memref<1x4x8x32xf32, #tpu.memory_space<vmem>>, vector<1x4x8x32xf32>,
    } else {
    }
    %c0 = arith.constant 0 : index
    %c0_1 = arith.constant 0 : index
    %c0_2 = arith.constant 0 : index
    %3 = vector.load %arg3[%c0, %c0_1, %c0_2] : memref<4x8x32xf32, #tpu.memory_space<vmem>>, vector<4x8x32xf32>
    %cst = arith.constant 0.176776692 : f32
    %4 = vector.broadcast %cst : f32 to vector<4x8x32xf32>
    %5 = arith.mulf %3, %4 : vector<4x8x32xf32>
    %c0_3 = arith.constant 0 : index
    %c0_4 = arith.constant 0 : index
    %c0_5 = arith.constant 0 : index
    %6 = vector.load %arg4[%c0_3, %c0_4, %c0_5] : memref<4x128x32xf32, #tpu.memory_space<vmem>>, vector<4x128x32xf32>
    %c0_6 = arith.constant 0 : index
    %c0_7 = arith.constant 0 : index
    %c0_8 = arith.constant 0 : index
    %7 = vector.load %arg5[%c0_6, %c0_7, %c0_8] : memref<4x128x32xf32, #tpu.memory_space<vmem>>, vector<4x128x32xf32>
    %c128_i32 = arith.constant 128 : i32
    %8 = arith.muli %arg2, %c128_i32 : i32
    %9 = tpu.iota {dimensions = array<i32: 2>} : vector<4x8x128xi32>
    %10 = vector.broadcast %8 : i32 to vector<4x8x128xi32>
    %11 = arith.addi %10, %9 : vector<4x8x128xi32>
    %c8_i32 = arith.constant 8 : i32
    %12 = vector.broadcast %c8_i32 : i32 to vector<4x8x128xi32>
    %13 = arith.cmpi slt, %11, %12 : vector<4x8x128xi32>
    %cst_9 = arith.constant dense<0.000000e+00> : vector<4x8x128xf32>
    %14 = tpu.matmul %5, %6, %cst_9 {dimension_numbers = #tpu.dot_dimension_numbers<[2], [2], [1], [1], [0, 0, 0, 1, 1, 1], [0], [0]>} : vector<4x8x32xf32>, vector<4x128x32xf32>, vector<4x8x128xf32> -> vector<4x8x128xf32>
    %cst_10 = arith.constant -1.000000e+30 : f32
    %15 = vector.broadcast %cst_10 : f32 to vector<4x8x128xf32>
    %16 = arith.select %13, %14, %15 : vector<4x8x128xi1>, vector<4x8x128xf32>
    %c0_11 = arith.constant 0 : index
    %c0_12 = arith.constant 0 : index
    %c0_13 = arith.constant 0 : index
    %c0_14 = arith.constant 0 : index
    %17 = vector.load %arg8[%c0_11, %c0_12, %c0_13, %c0_14] : memref<1x4x8x1xf32, #tpu.memory_space<vmem>>, vector<1x4x8x1xf32>
    %18 = vector.shape_cast %17 : vector<1x4x8x1xf32> to vector<4x8x1xf32>
    %cst_15 = arith.constant dense<0xFF800000> : vector<4x8xf32>
    %19 = vector.multi_reduction <maximumf>, %16, %cst_15 [2] : vector<4x8x128xf32> to vector<4x8xf32>
    %20 = vector.shape_cast %19 : vector<4x8xf32> to vector<4x8x1xf32>
    %21 = arith.maximumf %18, %20 : vector<4x8x1xf32>
    %22 = arith.subf %18, %21 : vector<4x8x1xf32>
    %23 = math.exp %22 : vector<4x8x1xf32>
    %24 = vector.broadcast %21 : vector<4x8x1xf32> to vector<4x8x128xf32>
    %25 = arith.subf %16, %24 : vector<4x8x128xf32>
    %26 = math.exp %25 : vector<4x8x128xf32>
    %c0_16 = arith.constant 0 : index
    %c0_17 = arith.constant 0 : index
    %c0_18 = arith.constant 0 : index
    %c0_19 = arith.constant 0 : index
    %27 = vector.load %arg9[%c0_16, %c0_17, %c0_18, %c0_19] : memref<1x4x8x1xf32, #tpu.memory_space<vmem>>, vector<1x4x8x1xf32>
    %28 = vector.shape_cast %27 : vector<1x4x8x1xf32> to vector<4x8x1xf32>
    %29 = arith.mulf %23, %28 : vector<4x8x1xf32>
    %cst_20 = arith.constant dense<0.000000e+00> : vector<4x8xf32>
    %30 = vector.multi_reduction <add>, %26, %cst_20 [2] : vector<4x8x128xf32> to vector<4x8xf32>
    %31 = vector.shape_cast %30 : vector<4x8xf32> to vector<4x8x1xf32>
    %32 = arith.addf %29, %31 : vector<4x8x1xf32>
    %cst_21 = arith.constant dense<0.000000e+00> : vector<4x8x32xf32>
    %33 = tpu.matmul %26, %7, %cst_21 {dimension_numbers = #tpu.dot_dimension_numbers<[2], [1], [1], [2], [0, 0, 0, 1, 1, 2], [0], [0]>} : vector<4x8x128xf32>, vector<4x128x32xf32>, vector<4x8x32xf32> -> vector<4x8x32xf32>
    %c0_22 = arith.constant 0 : index
    %c0_23 = arith.constant 0 : index
    %c0_24 = arith.constant 0 : index
    %c0_25 = arith.constant 0 : index
    %34 = vector.load %arg10[%c0_22, %c0_23, %c0_24, %c0_25] : memref<1x4x8x32xf32, #tpu.memory_space<vmem>>, vector<1x4x8x32xf32>
    %35 = vector.shape_cast %34 : vector<1x4x8x32xf32> to vector<4x8x32xf32>
    %36 = vector.broadcast %23 : vector<4x8x1xf32> to vector<4x8x32xf32>
    %37 = arith.mulf %36, %35 : vector<4x8x32xf32>
    %38 = arith.addf %37, %33 : vector<4x8x32xf32>
    %c0_26 = arith.constant 0 : index
    %c0_27 = arith.constant 0 : index
    %c0_28 = arith.constant 0 : index
    %c0_29 = arith.constant 0 : index
    %39 = vector.load %arg10[%c0_26, %c0_27, %c0_28, %c0_29] : memref<1x4x8x32xf32, #tpu.memory_space<vmem>>, vector<1x4x8x32xf32>
    %40 = vector.shape_cast %39 : vector<1x4x8x32xf32> to vector<4x8x32xf32>
    %41 = vector.shape_cast %38 : vector<4x8x32xf32> to vector<1x4x8x32xf32>
    tpu.vector_store %arg10[%c0_26, %c0_27, %c0_28, %c0_29], %41 {strides = array<i32>} : memref<1x4x8x32xf32, #tpu.memory_space<vmem>>, vector<1x4x8x32xf32>,
    %c0_30 = arith.constant 0 : index
    %c0_31 = arith.constant 0 : index
    %c0_32 = arith.constant 0 : index
    %c0_33 = arith.constant 0 : index
    %42 = vector.load %arg8[%c0_30, %c0_31, %c0_32, %c0_33] : memref<1x4x8x1xf32, #tpu.memory_space<vmem>>, vector<1x4x8x1xf32>
    %43 = vector.shape_cast %42 : vector<1x4x8x1xf32> to vector<4x8x1xf32>
    %44 = vector.shape_cast %21 : vector<4x8x1xf32> to vector<1x4x8x1xf32>
    tpu.vector_store %arg8[%c0_30, %c0_31, %c0_32, %c0_33], %44 {strides = array<i32>} : memref<1x4x8x1xf32, #tpu.memory_space<vmem>>, vector<1x4x8x1xf32>,
    %c0_34 = arith.constant 0 : index
    %c0_35 = arith.constant 0 : index
    %c0_36 = arith.constant 0 : index
    %c0_37 = arith.constant 0 : index
    %45 = vector.load %arg9[%c0_34, %c0_35, %c0_36, %c0_37] : memref<1x4x8x1xf32, #tpu.memory_space<vmem>>, vector<1x4x8x1xf32>
    %46 = vector.shape_cast %45 : vector<1x4x8x1xf32> to vector<4x8x1xf32>
    %47 = vector.shape_cast %32 : vector<4x8x1xf32> to vector<1x4x8x1xf32>
    tpu.vector_store %arg9[%c0_34, %c0_35, %c0_36, %c0_37], %47 {strides = array<i32>} : memref<1x4x8x1xf32, #tpu.memory_space<vmem>>, vector<1x4x8x1xf32>,
    %48 = tpu.reciprocal %32 {approx = true} : vector<4x8x1xf32> -> vector<4x8x1xf32>
    %49 = arith.mulf %32, %48 : vector<4x8x1xf32>
    %cst_38 = arith.constant 2.000000e+00 : f32
    %50 = vector.broadcast %cst_38 : f32 to vector<4x8x1xf32>
    %51 = arith.subf %50, %49 : vector<4x8x1xf32>
    %52 = arith.mulf %48, %51 : vector<4x8x1xf32>
    %53 = vector.broadcast %52 : vector<4x8x1xf32> to vector<4x8x128xf32>
    %54 = arith.mulf %26, %53 : vector<4x8x128xf32>
    %c0_39 = arith.constant 0 : index
    %c0_40 = arith.constant 0 : index
    %c0_41 = arith.constant 0 : index
    %55 = vector.load %arg7[%c0_39, %c0_40, %c0_41] : memref<4x8x128xf32, #tpu.memory_space<vmem>>, vector<4x8x128xf32>
    tpu.vector_store %arg7[%c0_39, %c0_40, %c0_41], %54 {strides = array<i32>} : memref<4x8x128xf32, #tpu.memory_space<vmem>>, vector<4x8x128xf32>,
    %c0_i32_42 = arith.constant 0 : i32
    %56 = arith.cmpi eq, %arg2, %c0_i32_42 : i32
    %57 = arith.extui %56 : i1 to i32
    %c0_i32_43 = arith.constant 0 : i32
    %58 = arith.cmpi ne, %57, %c0_i32_43 : i32
    scf.if %58 {
      %c0_44 = arith.constant 0 : index
      %c0_45 = arith.constant 0 : index
      %c0_46 = arith.constant 0 : index
      %c0_47 = arith.constant 0 : index
      %59 = vector.load %arg9[%c0_44, %c0_45, %c0_46, %c0_47] : memref<1x4x8x1xf32, #tpu.memory_space<vmem>>, vector<1x4x8x1xf32>
      %60 = vector.shape_cast %59 : vector<1x4x8x1xf32> to vector<4x8x1xf32>
      %61 = tpu.reciprocal %60 {approx = true} : vector<4x8x1xf32> -> vector<4x8x1xf32>
      %62 = arith.mulf %60, %61 : vector<4x8x1xf32>
      %cst_48 = arith.constant 2.000000e+00 : f32
      %63 = vector.broadcast %cst_48 : f32 to vector<4x8x1xf32>
      %64 = arith.subf %63, %62 : vector<4x8x1xf32>
      %65 = arith.mulf %61, %64 : vector<4x8x1xf32>
      %c0_49 = arith.constant 0 : index
      %c0_50 = arith.constant 0 : index
      %c0_51 = arith.constant 0 : index
      %c0_52 = arith.constant 0 : index
      %66 = vector.load %arg10[%c0_49, %c0_50, %c0_51, %c0_52] : memref<1x4x8x32xf32, #tpu.memory_space<vmem>>, vector<1x4x8x32xf32>
      %67 = vector.shape_cast %66 : vector<1x4x8x32xf32> to vector<4x8x32xf32>
      %68 = vector.broadcast %65 : vector<4x8x1xf32> to vector<4x8x32xf32>
      %69 = arith.mulf %67, %68 : vector<4x8x32xf32>
      %c0_53 = arith.constant 0 : index
      %c0_54 = arith.constant 0 : index
      %c0_55 = arith.constant 0 : index
      %70 = vector.load %arg6[%c0_53, %c0_54, %c0_55] : memref<4x8x32xf32, #tpu.memory_space<vmem>>, vector<4x8x32xf32>
      tpu.vector_store %arg6[%c0_53, %c0_54, %c0_55], %69 {strides = array<i32>} : memref<4x8x32xf32, #tpu.memory_space<vmem>>, vector<4x8x32xf32>,
    } else {
    }
    return
  }
  func.func @transform_0(%arg0: i32, %arg1: i32, %arg2: i32) -> (i32, i32, i32) {
    %c0_i32 = arith.constant 0 : i32
    %c0_i32_0 = arith.constant 0 : i32
    return %arg0, %arg1, %c0_i32 : i32, i32, i32
  }
  func.func @transform_1(%arg0: i32, %arg1: i32, %arg2: i32) -> (i32, i32, i32) {
    %c0_i32 = arith.constant 0 : i32
    %c0_i32_0 = arith.constant 0 : i32
    return %arg0, %arg2, %c0_i32 : i32, i32, i32
  }
  func.func @transform_2(%arg0: i32, %arg1: i32, %arg2: i32) -> (i32, i32, i32) {
    %c0_i32 = arith.constant 0 : i32
    %c0_i32_0 = arith.constant 0 : i32
    return %arg0, %arg2, %c0_i32 : i32, i32, i32
  }
  func.func @transform_3(%arg0: i32, %arg1: i32, %arg2: i32) -> (i32, i32, i32) {
    %c0_i32 = arith.constant 0 : i32
    %c0_i32_0 = arith.constant 0 : i32
    return %arg0, %arg1, %c0_i32 : i32, i32, i32
  }
  func.func @transform_4(%arg0: i32, %arg1: i32, %arg2: i32) -> (i32, i32, i32) {
    %c0_i32 = arith.constant 0 : i32
    return %arg0, %arg1, %arg2 : i32, i32, i32
  }
}

</mosaic_0001>

<llo_original>
// kernel: tpu_custom_call.1
$region0: #{tpu_custom_call.1}
  #allocation0 [shape = 'u32[]', space=smem, size = 0x4, offset = 0x4, fixed_abs, tag = 'smem constant byte address 0x4 - core index']
  #allocation1 [shape = 'u32[72,128]{1,0:T(1,128)}', space=vmem, size = 0x9000, scoped, tag = 'internal scratch']
  #allocation2 [shape = 'f32[1,4,8,1]{3,2,1,0:T(8,128)}', space=vmem, size = 0x4000, scoped, tag = 'scratch operand']
  #allocation3 [shape = 'f32[1,4,8,1]{3,2,1,0:T(8,128)}', space=vmem, size = 0x4000, scoped, tag = 'scratch operand']
  #allocation4 [shape = 'f32[1,4,8,32]{3,2,1,0:T(8,128)}', space=vmem, size = 0x4000, scoped, tag = 'scratch operand']
  %s0 = inlined_call_operand.vmem [shape: f32[8,8,32], index: 0, kind: input, shape index: {}]
  %s1 = inlined_call_operand.vmem [shape: f32[8,128,32], index: 1, kind: input, shape index: {}]
  %s2 = inlined_call_operand.vmem [shape: f32[8,128,32], index: 2, kind: input, shape index: {}]
  %s3 = inlined_call_operand.hbm [shape: f32[8,8,32], index: 3, kind: output, shape index: {0}]
  %s4 = inlined_call_operand.hbm [shape: f32[8,8,128], index: 4, kind: output, shape index: {1}]
  %5 = xla_tuple %s3, %s4
  %s6 = sld [smem:[#allocation0]]
  $region61: #{tpu_custom_call.1} parent=0
    _
  %s8 = ssub.s32 1, %s6
  %s9 = scalar_select 0, %s8, %s6
  $region1: #{tpu_custom_call.1} parent=0
    #allocation5 [shape = 'u8[32768]{0}', space=vmem, size = 0x8000, scoped, tag = 'output window, operand 0']
    #allocation6 [shape = 's32[2]{0}', space=sflag, size = 0x8, scoped, tag = 'scoped memory for tpu_custom_call.1']
    #allocation7 [shape = 'u8[32768]{0}', space=vmem, size = 0x8000, scoped, tag = 'output window, operand 1']
    #allocation8 [shape = 's32[2]{0}', space=sflag, size = 0x8, scoped, tag = 'scoped memory for tpu_custom_call.1']
    %10 = vsyncpa [#allocation6], 0
    %s11 = scalar_lea.sflag [#allocation6], 1
    %12 = vsyncpa %s11, 0
    %13 = vsyncpa [#allocation8], 0
    %s14 = scalar_lea.sflag [#allocation8], 1
    %15 = vsyncpa %s14, 0
    loop: start=0, step=1, limit=4
    $region2: #{tpu_custom_call.1} parent=1 // loop_pre_header
      _
    $region3: #{tpu_custom_call.1} parent=1 // loop_header
      %s17 = sphi 0, %s21
      %p18 = scmp.ge.s32.totalorder %s17, 4
      %s24 = sphi 0, %s43
      %s25 = sphi 0, %s39
      %s26 = sphi 0, %s35
      %s27 = sphi 0, %s24
      %s28 = sphi 0, %s25
      %s29 = sphi 0, %s26
      %s30 = sphi 0, %s27
      %s31 = sphi 0, %s28
      %s32 = sphi 0, %s29
      %s48 = sphi 0, %s50
      %s51 = sphi 0, %s48
      %s52 = sphi 0, %s51
      %s68 = sphi 0, %s52
      %s76 = sphi 0, %s78
      %s79 = sphi 0, %s76
      %s80 = sphi 0, %s79
      %s96 = sphi 0, %s80
      %s104 = sphi 0, %s106
      %s107 = sphi 0, %s104
      %s108 = sphi 0, %s107
      %s124 = sphi 0, %s108
      %s132 = sphi 0, %s134
      %s135 = sphi 0, %s132
      %s136 = sphi 0, %s135
      %s152 = sphi 0, %s136
      %s162 = sphi 0, %s164
      %s165 = sphi 0, %s162
      %s166 = sphi 0, %s165
      %s182 = sphi 0, %s166
    $region4: #{tpu_custom_call.1} parent=1 // loop_header_branch
      %20 = sbr.rel (%p18) target = $region8
    $region5: #{tpu_custom_call.1} parent=1 // loop_body
      %s22 = ssub.s32 %s17, 1
      %s23 = ssub.s32 %s17, 2
      %s33 = sadd.s32 1, %s26
      %p34 = scmp.ge.s32.totalorder %s33, 1
      %s35 = scalar_select %p34, 0, %s33
      %s36 = sadd.s32 1, %s25
      %s37 = scalar_select %p34, %s36, %s25
      %p38 = scmp.ge.s32.totalorder %s37, 1
      %s39 = scalar_select %p38, 0, %s37
      %s40 = sadd.s32 1, %s24
      %s41 = scalar_select %p38, %s40, %s24
      %p42 = scmp.ge.s32.totalorder %s41, 2
      %s43 = scalar_select %p42, 0, %s41
      %s44 = ssub.s32 %s24, %s43
      %s45 = ssub.s32 %s25, %s39
      %s46 = sor.u32 %s44, %s45
      %p47 = scmp.eq.s32.totalorder %s46, 0
      %s49 = sadd.s32 %s48, 1
      %s50 = scalar_select %p47, %s48, %s49
      %p53 = pneg %p47
      %p54 = scmp.eq.s32.totalorder %s17, 1
      %p55 = por %p53, %p54
      %p56 = scmp.ne.s32.totalorder %s48, %s51
      %p57 = scmp.eq.s32.totalorder %s17, 0
      %p58 = por %p56, %p57
      %p59 = scmp.ne.s32.totalorder %s48, %s51
      %p60 = scmp.eq.s32.totalorder %s22, 1
      %p61 = por %p59, %p60
      %p62 = scmp.ne.s32.totalorder %s51, %s52
      %p63 = scmp.eq.s32.totalorder %s22, 0
      %p64 = por %p62, %p63
      %p65 = scmp.ne.s32.totalorder %s51, %s52
      %p66 = scmp.eq.s32.totalorder %s23, 1
      %p67 = por %p65, %p66
      %p69 = scmp.ne.s32.totalorder %s52, %s68
      %p70 = scmp.eq.s32.totalorder %s23, 0
      %p71 = por %p69, %p70
      %s72 = ssub.s32 %s24, %s43
      %s73 = ssub.s32 %s26, %s35
      %s74 = sor.u32 %s72, %s73
      %p75 = scmp.eq.s32.totalorder %s74, 0
      %s77 = sadd.s32 %s76, 1
      %s78 = scalar_select %p75, %s76, %s77
      %p81 = pneg %p75
      %p82 = scmp.eq.s32.totalorder %s17, 1
      %p83 = por %p81, %p82
      %p84 = scmp.ne.s32.totalorder %s76, %s79
      %p85 = scmp.eq.s32.totalorder %s17, 0
      %p86 = por %p84, %p85
      %p87 = scmp.ne.s32.totalorder %s76, %s79
      %p88 = scmp.eq.s32.totalorder %s22, 1
      %p89 = por %p87, %p88
      %p90 = scmp.ne.s32.totalorder %s79, %s80
      %p91 = scmp.eq.s32.totalorder %s22, 0
      %p92 = por %p90, %p91
      %p93 = scmp.ne.s32.totalorder %s79, %s80
      %p94 = scmp.eq.s32.totalorder %s23, 1
      %p95 = por %p93, %p94
      %p97 = scmp.ne.s32.totalorder %s80, %s96
      %p98 = scmp.eq.s32.totalorder %s23, 0
      %p99 = por %p97, %p98
      %s100 = ssub.s32 %s24, %s43
      %s101 = ssub.s32 %s26, %s35
      %s102 = sor.u32 %s100, %s101
      %p103 = scmp.eq.s32.totalorder %s102, 0
      %s105 = sadd.s32 %s104, 1
      %s106 = scalar_select %p103, %s104, %s105
      %p109 = pneg %p103
      %p110 = scmp.eq.s32.totalorder %s17, 1
      %p111 = por %p109, %p110
      %p112 = scmp.ne.s32.totalorder %s104, %s107
      %p113 = scmp.eq.s32.totalorder %s17, 0
      %p114 = por %p112, %p113
      %p115 = scmp.ne.s32.totalorder %s104, %s107
      %p116 = scmp.eq.s32.totalorder %s22, 1
      %p117 = por %p115, %p116
      %p118 = scmp.ne.s32.totalorder %s107, %s108
      %p119 = scmp.eq.s32.totalorder %s22, 0
      %p120 = por %p118, %p119
      %p121 = scmp.ne.s32.totalorder %s107, %s108
      %p122 = scmp.eq.s32.totalorder %s23, 1
      %p123 = por %p121, %p122
      %p125 = scmp.ne.s32.totalorder %s108, %s124
      %p126 = scmp.eq.s32.totalorder %s23, 0
      %p127 = por %p125, %p126
      %s128 = ssub.s32 %s24, %s43
      %s129 = ssub.s32 %s25, %s39
      %s130 = sor.u32 %s128, %s129
      %p131 = scmp.eq.s32.totalorder %s130, 0
      %s133 = sadd.s32 %s132, 1
      %s134 = scalar_select %p131, %s132, %s133
      %p137 = pneg %p131
      %p138 = scmp.eq.s32.totalorder %s17, 1
      %p139 = por %p137, %p138
      %p140 = scmp.ne.s32.totalorder %s132, %s135
      %p141 = scmp.eq.s32.totalorder %s17, 0
      %p142 = por %p140, %p141
      %p143 = scmp.ne.s32.totalorder %s132, %s135
      %p144 = scmp.eq.s32.totalorder %s22, 1
      %p145 = por %p143, %p144
      %p146 = scmp.ne.s32.totalorder %s135, %s136
      %p147 = scmp.eq.s32.totalorder %s22, 0
      %p148 = por %p146, %p147
      %p149 = scmp.ne.s32.totalorder %s135, %s136
      %p150 = scmp.eq.s32.totalorder %s23, 1
      %p151 = por %p149, %p150
      %p153 = scmp.ne.s32.totalorder %s136, %s152
      %p154 = scmp.eq.s32.totalorder %s23, 0
      %p155 = por %p153, %p154
      %s156 = ssub.s32 %s24, %s43
      %s157 = ssub.s32 %s25, %s39
      %s158 = sor.u32 %s156, %s157
      %s159 = ssub.s32 %s26, %s35
      %s160 = sor.u32 %s158, %s159
      %p161 = scmp.eq.s32.totalorder %s160, 0
      %s163 = sadd.s32 %s162, 1
      %s164 = scalar_select %p161, %s162, %s163
      %p167 = pneg %p161
      %p168 = scmp.eq.s32.totalorder %s17, 1
      %p169 = por %p167, %p168
      %p170 = scmp.ne.s32.totalorder %s162, %s165
      %p171 = scmp.eq.s32.totalorder %s17, 0
      %p172 = por %p170, %p171
      %p173 = scmp.ne.s32.totalorder %s162, %s165
      %p174 = scmp.eq.s32.totalorder %s22, 1
      %p175 = por %p173, %p174
      %p176 = scmp.ne.s32.totalorder %s165, %s166
      %p177 = scmp.eq.s32.totalorder %s22, 0
      %p178 = por %p176, %p177
      %p179 = scmp.ne.s32.totalorder %s165, %s166
      %p180 = scmp.eq.s32.totalorder %s23, 1
      %p181 = por %p179, %p180
      %p183 = scmp.ne.s32.totalorder %s166, %s182
      %p184 = scmp.eq.s32.totalorder %s23, 0
      %p185 = por %p183, %p184
      %p186 = scmp.le.s32.totalorder 1, %s17
      %p187 = scmp.lt.s32.totalorder %s17, 3
      %p188 = pnand %p186, %p187
      %p189 = pneg %p188
      // Predicated region
      $region9: #{tpu_custom_call.1} parent=5 // pred_check
        _
      $region10: #{tpu_custom_call.1} parent=5 // pred_check_branch
        %191 = sbr.rel (%p188) target = $region12
      $region11: #{tpu_custom_call.1} parent=5 // pred_region
        %s192 = ssub.s32 %s17, 1
      $region12: #{tpu_custom_call.1} parent=5 // pred_fallthru
        _
      %p193 = scmp.lt.s32.totalorder %s17, 2
      // Predicated region
      $region13: #{tpu_custom_call.1} parent=5 // pred_check
        %p194 = pneg %p193
      $region14: #{tpu_custom_call.1} parent=5 // pred_check_branch
        %196 = sbr.rel (%p194) target = $region16
      $region15: #{tpu_custom_call.1} parent=5 // pred_region
        // Predicated region
        $region17: #{tpu_custom_call.1} parent=15 // pred_check
          %p197 = pneg %p58
        $region18: #{tpu_custom_call.1} parent=15 // pred_check_branch
          %199 = sbr.rel (%p197) target = $region20
        $region19: #{tpu_custom_call.1} parent=15 // pred_region
          %s200 = smul.u32 4, %s24
          %p201 = scmp.lt.s32.totalorder %s200, 7
          %s202 = scalar_select %p201, %s200, 7
          %p203 = scmp.lt.s32.totalorder %s25, 0
          %s204 = scalar_select %p203, %s25, 0
          %s205 = sadd.s32 %s204, %s202
          %s206 = smul.addr %s205, 8
          %s207 = scalar_lea.vmem %s0, %s206
          %s208 = smul.u32 4, %s24
        $region20: #{tpu_custom_call.1} parent=15 // pred_fallthru
          _
        // Predicated region
        $region21: #{tpu_custom_call.1} parent=15 // pred_check
          %p209 = pneg %p86
        $region22: #{tpu_custom_call.1} parent=15 // pred_check_branch
          %211 = sbr.rel (%p209) target = $region24
        $region23: #{tpu_custom_call.1} parent=15 // pred_region
          %s212 = smul.u32 4, %s24
          %s213 = smul.u32 16, %s26
          %p214 = scmp.lt.s32.totalorder %s212, 7
          %s215 = scalar_select %p214, %s212, 7
          %p216 = scmp.lt.s32.totalorder %s213, 15
          %s217 = scalar_select %p216, %s213, 15
          %s218 = smul.addr %s215, 16
          %s219 = sadd.s32 %s217, %s218
          %s220 = smul.addr %s219, 8
          %s221 = scalar_lea.vmem %s1, %s220
          %s222 = smul.u32 4, %s24
          %s223 = smul.u32 16, %s26
        $region24: #{tpu_custom_call.1} parent=15 // pred_fallthru
          _
        // Predicated region
        $region25: #{tpu_custom_call.1} parent=15 // pred_check
          %p224 = pneg %p114
        $region26: #{tpu_custom_call.1} parent=15 // pred_check_branch
          %226 = sbr.rel (%p224) target = $region28
        $region27: #{tpu_custom_call.1} parent=15 // pred_region
          %s227 = smul.u32 4, %s24
          %s228 = smul.u32 16, %s26
          %p229 = scmp.lt.s32.totalorder %s227, 7
          %s230 = scalar_select %p229, %s227, 7
          %p231 = scmp.lt.s32.totalorder %s228, 15
          %s232 = scalar_select %p231, %s228, 15
          %s233 = smul.addr %s230, 16
          %s234 = sadd.s32 %s232, %s233
          %s235 = smul.addr %s234, 8
          %s236 = scalar_lea.vmem %s2, %s235
          %s237 = smul.u32 4, %s24
          %s238 = smul.u32 16, %s26
        $region28: #{tpu_custom_call.1} parent=15 // pred_fallthru
          _
      $region16: #{tpu_custom_call.1} parent=5 // pred_fallthru
        _
      %p239 = scmp.le.s32.totalorder 1, %s17
      %p240 = scmp.lt.s32.totalorder %s17, 3
      %p241 = pnand %p239, %p240
      %p242 = pneg %p241
      // Predicated region
      $region29: #{tpu_custom_call.1} parent=5 // pred_check
        _
      $region30: #{tpu_custom_call.1} parent=5 // pred_check_branch
        %244 = sbr.rel (%p241) target = $region32
      $region31: #{tpu_custom_call.1} parent=5 // pred_region
        %s245 = ssub.s32 %s17, 1
        %s246 = smul.u32 4, %s27
        %p247 = scmp.lt.s32.totalorder %s246, 7
        %s248 = scalar_select %p247, %s246, 7
        %p249 = scmp.lt.s32.totalorder %s28, 0
        %s250 = scalar_select %p249, %s28, 0
        %s251 = sadd.s32 %s250, %s248
        %s252 = smul.addr %s251, 8
        %s253 = scalar_lea.vmem %s0, %s252
        %p254 = pneg %p64
        %p255 = pneg %p61
        %s256 = smul.u32 4, %s27
        %s257 = smul.u32 16, %s29
        %p258 = scmp.lt.s32.totalorder %s256, 7
        %s259 = scalar_select %p258, %s256, 7
        %p260 = scmp.lt.s32.totalorder %s257, 15
        %s261 = scalar_select %p260, %s257, 15
        %s262 = smul.addr %s259, 16
        %s263 = sadd.s32 %s261, %s262
        %s264 = smul.addr %s263, 8
        %s265 = scalar_lea.vmem %s1, %s264
        %p266 = pneg %p92
        %p267 = pneg %p89
        %s268 = smul.u32 4, %s27
        %s269 = smul.u32 16, %s29
        %p270 = scmp.lt.s32.totalorder %s268, 7
        %s271 = scalar_select %p270, %s268, 7
        %p272 = scmp.lt.s32.totalorder %s269, 15
        %s273 = scalar_select %p272, %s269, 15
        %s274 = smul.addr %s271, 16
        %s275 = sadd.s32 %s273, %s274
        %s276 = smul.addr %s275, 8
        %s277 = scalar_lea.vmem %s2, %s276
        %p278 = pneg %p120
        %p279 = pneg %p117
        %p280 = pneg %p148
        %p281 = pneg %p145
        %s282 = sand.u32 %s135, 1
        %s283 = scalar_lea.sflag [#allocation6], %s282
        %s284 = sand.u32 %s135, 1
        %s285 = smul.addr %s284, 32
        %s286 = scalar_lea.vmem [#allocation5], %s285
        %p287 = pneg %p178
        %p288 = pneg %p175
        %s289 = sand.u32 %s165, 1
        %s290 = scalar_lea.sflag [#allocation8], %s289
        %s291 = sand.u32 %s165, 1
        %s292 = smul.addr %s291, 32
        %s293 = scalar_lea.vmem [#allocation7], %s292
        %s294 = smul.u32 4, %s27
        %p295 = scmp.lt.s32.totalorder %s294, 7
        %s296 = scalar_select %p295, %s294, 7
        %p297 = scmp.lt.s32.totalorder %s28, 0
        %s298 = scalar_select %p297, %s28, 0
        %s299 = sadd.s32 %s298, %s296
        %s300 = smul.addr %s299, 8
        %s301 = scalar_lea.vmem %s0, %s300
        %s302 = smul.u32 4, %s27
        %s303 = smul.u32 4, %s27
        %s304 = smul.u32 16, %s29
        %p305 = scmp.lt.s32.totalorder %s303, 7
        %s306 = scalar_select %p305, %s303, 7
        %p307 = scmp.lt.s32.totalorder %s304, 15
        %s308 = scalar_select %p307, %s304, 15
        %s309 = smul.addr %s306, 16
        %s310 = sadd.s32 %s308, %s309
        %s311 = smul.addr %s310, 8
        %s312 = scalar_lea.vmem %s1, %s311
        %s313 = smul.u32 4, %s27
        %s314 = smul.u32 16, %s29
        %s315 = smul.u32 4, %s27
        %s316 = smul.u32 16, %s29
        %p317 = scmp.lt.s32.totalorder %s315, 7
        %s318 = scalar_select %p317, %s315, 7
        %p319 = scmp.lt.s32.totalorder %s316, 15
        %s320 = scalar_select %p319, %s316, 15
        %s321 = smul.addr %s318, 16
        %s322 = sadd.s32 %s320, %s321
        %s323 = smul.addr %s322, 8
        %s324 = scalar_lea.vmem %s2, %s323
        %s325 = smul.u32 4, %s27
        %s326 = smul.u32 16, %s29
        %s327 = smul.u32 4, %s27
        %s328 = smul.u32 4, %s27
        %p329 = scmp.eq.s32.totalorder %s29, 0
        // Predicated region
        $region33: #{tpu_custom_call.1} parent=31 // pred_check
          %p330 = pneg %p329
        $region34: #{tpu_custom_call.1} parent=31 // pred_check_branch
          %332 = sbr.rel (%p330) target = $region36
        $region35: #{tpu_custom_call.1} parent=31 // pred_region
          %vm333 = vcmask 7168
          %334 = vst.msk [vmem:[#allocation2] sm:$0xff] %vm333, -inf
          %335 = vst.msk [vmem:[#allocation2 + $0x8] sm:$0xff] %vm333, -inf
          %336 = vst.msk [vmem:[#allocation2 + $0x10] sm:$0xff] %vm333, -inf
          %337 = vst.msk [vmem:[#allocation2 + $0x18] sm:$0xff] %vm333, -inf
          %338 = vst.msk [vmem:[#allocation3] sm:$0xff] %vm333, 0.0
          %339 = vst.msk [vmem:[#allocation3 + $0x8] sm:$0xff] %vm333, 0.0
          %340 = vst.msk [vmem:[#allocation3 + $0x10] sm:$0xff] %vm333, 0.0
          %341 = vst.msk [vmem:[#allocation3 + $0x18] sm:$0xff] %vm333, 0.0
          %vm342 = vcmask 261120
          %343 = vst.msk [vmem:[#allocation4] sm:$0xff] %vm342, 0.0
          %344 = vst.msk [vmem:[#allocation4 + $0x8] sm:$0xff] %vm342, 0.0
          %345 = vst.msk [vmem:[#allocation4 + $0x10] sm:$0xff] %vm342, 0.0
          %346 = vst.msk [vmem:[#allocation4 + $0x18] sm:$0xff] %vm342, 0.0
        $region36: #{tpu_custom_call.1} parent=31 // pred_fallthru
          _
        %v347 = vld [vmem:[%s301] sm:$0xff]
        %v348 = vld [vmem:[%s301 + $0x8] sm:$0xff]
        %v349 = vld [vmem:[%s301 + $0x10] sm:$0xff]
        %v350 = vld [vmem:[%s301 + $0x18] sm:$0xff]
        %v351 = vmul.f32 %v347, 0.17677669
        %v352 = vmul.f32 %v348, 0.17677669
        %v353 = vmul.f32 %v349, 0.17677669
        %v354 = vmul.f32 %v350, 0.17677669
        %v355 = vld [vmem:[%s312] sm:$0xff]
        %v356 = vld [vmem:[%s312 + $0x8] sm:$0xff]
        %v357 = vld [vmem:[%s312 + $0x10] sm:$0xff]
        %v358 = vld [vmem:[%s312 + $0x18] sm:$0xff]
        %v359 = vld [vmem:[%s312 + $0x20] sm:$0xff]
        %v360 = vld [vmem:[%s312 + $0x28] sm:$0xff]
        %v361 = vld [vmem:[%s312 + $0x30] sm:$0xff]
        %v362 = vld [vmem:[%s312 + $0x38] sm:$0xff]
        %v363 = vld [vmem:[%s312 + $0x40] sm:$0xff]
        %v364 = vld [vmem:[%s312 + $0x48] sm:$0xff]
        %v365 = vld [vmem:[%s312 + $0x50] sm:$0xff]
        %v366 = vld [vmem:[%s312 + $0x58] sm:$0xff]
        %v367 = vld [vmem:[%s312 + $0x60] sm:$0xff]
        %v368 = vld [vmem:[%s312 + $0x68] sm:$0xff]
        %v369 = vld [vmem:[%s312 + $0x70] sm:$0xff]
        %v370 = vld [vmem:[%s312 + $0x78] sm:$0xff]
        %v371 = vld [vmem:[%s312 + $0x80] sm:$0xff]
        %v372 = vld [vmem:[%s312 + $0x88] sm:$0xff]
        %v373 = vld [vmem:[%s312 + $0x90] sm:$0xff]
        %v374 = vld [vmem:[%s312 + $0x98] sm:$0xff]
        %v375 = vld [vmem:[%s312 + $0xa0] sm:$0xff]
        %v376 = vld [vmem:[%s312 + $0xa8] sm:$0xff]
        %v377 = vld [vmem:[%s312 + $0xb0] sm:$0xff]
        %v378 = vld [vmem:[%s312 + $0xb8] sm:$0xff]
        %v379 = vld [vmem:[%s312 + $0xc0] sm:$0xff]
        %v380 = vld [vmem:[%s312 + $0xc8] sm:$0xff]
        %v381 = vld [vmem:[%s312 + $0xd0] sm:$0xff]
        %v382 = vld [vmem:[%s312 + $0xd8] sm:$0xff]
        %v383 = vld [vmem:[%s312 + $0xe0] sm:$0xff]
        %v384 = vld [vmem:[%s312 + $0xe8] sm:$0xff]
        %v385 = vld [vmem:[%s312 + $0xf0] sm:$0xff]
        %v386 = vld [vmem:[%s312 + $0xf8] sm:$0xff]
        %v387 = vld [vmem:[%s312 + $0x100] sm:$0xff]
        %v388 = vld [vmem:[%s312 + $0x108] sm:$0xff]
        %v389 = vld [vmem:[%s312 + $0x110] sm:$0xff]
        %v390 = vld [vmem:[%s312 + $0x118] sm:$0xff]
        %v391 = vld [vmem:[%s312 + $0x120] sm:$0xff]
        %v392 = vld [vmem:[%s312 + $0x128] sm:$0xff]
        %v393 = vld [vmem:[%s312 + $0x130] sm:$0xff]
        %v394 = vld [vmem:[%s312 + $0x138] sm:$0xff]
        %v395 = vld [vmem:[%s312 + $0x140] sm:$0xff]
        %v396 = vld [vmem:[%s312 + $0x148] sm:$0xff]
        %v397 = vld [vmem:[%s312 + $0x150] sm:$0xff]
        %v398 = vld [vmem:[%s312 + $0x158] sm:$0xff]
        %v399 = vld [vmem:[%s312 + $0x160] sm:$0xff]
        %v400 = vld [vmem:[%s312 + $0x168] sm:$0xff]
        %v401 = vld [vmem:[%s312 + $0x170] sm:$0xff]
        %v402 = vld [vmem:[%s312 + $0x178] sm:$0xff]
        %v403 = vld [vmem:[%s312 + $0x180] sm:$0xff]
        %v404 = vld [vmem:[%s312 + $0x188] sm:$0xff]
        %v405 = vld [vmem:[%s312 + $0x190] sm:$0xff]
        %v406 = vld [vmem:[%s312 + $0x198] sm:$0xff]
        %v407 = vld [vmem:[%s312 + $0x1a0] sm:$0xff]
        %v408 = vld [vmem:[%s312 + $0x1a8] sm:$0xff]
        %v409 = vld [vmem:[%s312 + $0x1b0] sm:$0xff]
        %v410 = vld [vmem:[%s312 + $0x1b8] sm:$0xff]
        %v411 = vld [vmem:[%s312 + $0x1c0] sm:$0xff]
        %v412 = vld [vmem:[%s312 + $0x1c8] sm:$0xff]
        %v413 = vld [vmem:[%s312 + $0x1d0] sm:$0xff]
        %v414 = vld [vmem:[%s312 + $0x1d8] sm:$0xff]
        %v415 = vld [vmem:[%s312 + $0x1e0] sm:$0xff]
        %v416 = vld [vmem:[%s312 + $0x1e8] sm:$0xff]
        %v417 = vld [vmem:[%s312 + $0x1f0] sm:$0xff]
        %v418 = vld [vmem:[%s312 + $0x1f8] sm:$0xff]
        %v419 = vld [vmem:[%s324] sm:$0xff]
        %v420 = vld [vmem:[%s324 + $0x8] sm:$0xff]
        %v421 = vld [vmem:[%s324 + $0x10] sm:$0xff]
        %v422 = vld [vmem:[%s324 + $0x18] sm:$0xff]
        %v423 = vld [vmem:[%s324 + $0x20] sm:$0xff]
        %v424 = vld [vmem:[%s324 + $0x28] sm:$0xff]
        %v425 = vld [vmem:[%s324 + $0x30] sm:$0xff]
        %v426 = vld [vmem:[%s324 + $0x38] sm:$0xff]
        %v427 = vld [vmem:[%s324 + $0x40] sm:$0xff]
        %v428 = vld [vmem:[%s324 + $0x48] sm:$0xff]
        %v429 = vld [vmem:[%s324 + $0x50] sm:$0xff]
        %v430 = vld [vmem:[%s324 + $0x58] sm:$0xff]
        %v431 = vld [vmem:[%s324 + $0x60] sm:$0xff]
        %v432 = vld [vmem:[%s324 + $0x68] sm:$0xff]
        %v433 = vld [vmem:[%s324 + $0x70] sm:$0xff]
        %v434 = vld [vmem:[%s324 + $0x78] sm:$0xff]
        %v435 = vld [vmem:[%s324 + $0x80] sm:$0xff]
        %v436 = vld [vmem:[%s324 + $0x88] sm:$0xff]
        %v437 = vld [vmem:[%s324 + $0x90] sm:$0xff]
        %v438 = vld [vmem:[%s324 + $0x98] sm:$0xff]
        %v439 = vld [vmem:[%s324 + $0xa0] sm:$0xff]
        %v440 = vld [vmem:[%s324 + $0xa8] sm:$0xff]
        %v441 = vld [vmem:[%s324 + $0xb0] sm:$0xff]
        %v442 = vld [vmem:[%s324 + $0xb8] sm:$0xff]
        %v443 = vld [vmem:[%s324 + $0xc0] sm:$0xff]
        %v444 = vld [vmem:[%s324 + $0xc8] sm:$0xff]
        %v445 = vld [vmem:[%s324 + $0xd0] sm:$0xff]
        %v446 = vld [vmem:[%s324 + $0xd8] sm:$0xff]
        %v447 = vld [vmem:[%s324 + $0xe0] sm:$0xff]
        %v448 = vld [vmem:[%s324 + $0xe8] sm:$0xff]
        %v449 = vld [vmem:[%s324 + $0xf0] sm:$0xff]
        %v450 = vld [vmem:[%s324 + $0xf8] sm:$0xff]
        %v451 = vld [vmem:[%s324 + $0x100] sm:$0xff]
        %v452 = vld [vmem:[%s324 + $0x108] sm:$0xff]
        %v453 = vld [vmem:[%s324 + $0x110] sm:$0xff]
        %v454 = vld [vmem:[%s324 + $0x118] sm:$0xff]
        %v455 = vld [vmem:[%s324 + $0x120] sm:$0xff]
        %v456 = vld [vmem:[%s324 + $0x128] sm:$0xff]
        %v457 = vld [vmem:[%s324 + $0x130] sm:$0xff]
        %v458 = vld [vmem:[%s324 + $0x138] sm:$0xff]
        %v459 = vld [vmem:[%s324 + $0x140] sm:$0xff]
        %v460 = vld [vmem:[%s324 + $0x148] sm:$0xff]
        %v461 = vld [vmem:[%s324 + $0x150] sm:$0xff]
        %v462 = vld [vmem:[%s324 + $0x158] sm:$0xff]
        %v463 = vld [vmem:[%s324 + $0x160] sm:$0xff]
        %v464 = vld [vmem:[%s324 + $0x168] sm:$0xff]
        %v465 = vld [vmem:[%s324 + $0x170] sm:$0xff]
        %v466 = vld [vmem:[%s324 + $0x178] sm:$0xff]
        %v467 = vld [vmem:[%s324 + $0x180] sm:$0xff]
        %v468 = vld [vmem:[%s324 + $0x188] sm:$0xff]
        %v469 = vld [vmem:[%s324 + $0x190] sm:$0xff]
        %v470 = vld [vmem:[%s324 + $0x198] sm:$0xff]
        %v471 = vld [vmem:[%s324 + $0x1a0] sm:$0xff]
        %v472 = vld [vmem:[%s324 + $0x1a8] sm:$0xff]
        %v473 = vld [vmem:[%s324 + $0x1b0] sm:$0xff]
        %v474 = vld [vmem:[%s324 + $0x1b8] sm:$0xff]
        %v475 = vld [vmem:[%s324 + $0x1c0] sm:$0xff]
        %v476 = vld [vmem:[%s324 + $0x1c8] sm:$0xff]
        %v477 = vld [vmem:[%s324 + $0x1d0] sm:$0xff]
        %v478 = vld [vmem:[%s324 + $0x1d8] sm:$0xff]
        %v479 = vld [vmem:[%s324 + $0x1e0] sm:$0xff]
        %v480 = vld [vmem:[%s324 + $0x1e8] sm:$0xff]
        %v481 = vld [vmem:[%s324 + $0x1f0] sm:$0xff]
        %v482 = vld [vmem:[%s324 + $0x1f8] sm:$0xff]
        %s483 = smul.u32 %s29, 128
        %v484 = vlaneseq
        %v485 = vand.u32 %v484, 127
        %v486 = vstv %s483
        %v487 = vadd.s32 %v486, %v485
        %vm488 = vcmp.lt.s32.totalorder %v487, 8
        %vm489 = vcmask 261120
        %v491 = vsel %vm489, %v351, 0
        %v494 = vsel %vm489, %v355, 0
        %v497 = vsel %vm489, %v356, 0
        %v500 = vsel %vm489, %v357, 0
        %v503 = vsel %vm489, %v358, 0
        %v506 = vsel %vm489, %v359, 0
        %v509 = vsel %vm489, %v360, 0
        %v512 = vsel %vm489, %v361, 0
        %v515 = vsel %vm489, %v362, 0
        %v518 = vsel %vm489, %v363, 0
        %v521 = vsel %vm489, %v364, 0
        %v524 = vsel %vm489, %v365, 0
        %v527 = vsel %vm489, %v366, 0
        %v530 = vsel %vm489, %v367, 0
        %v533 = vsel %vm489, %v368, 0
        %v536 = vsel %vm489, %v369, 0
        %v539 = vsel %vm489, %v370, 0
        %541 = vmatpush.xpose.msra.mxu0 %v539
        %542 = vmatpush.xpose.msra.mxu0 %v536
        %543 = vmatpush.xpose.msra.mxu0 %v533
        %544 = vmatpush.xpose.msra.mxu0 %v530
        %545 = vmatpush.xpose.msra.mxu0 %v527
        %546 = vmatpush.xpose.msra.mxu0 %v524
        %547 = vmatpush.xpose.msra.mxu0 %v521
        %548 = vmatpush.xpose.msra.mxu0 %v518
        %549 = vmatpush.xpose.msra.mxu0 %v515
        %550 = vmatpush.xpose.msra.mxu0 %v512
        %551 = vmatpush.xpose.msra.mxu0 %v509
        %552 = vmatpush.xpose.msra.mxu0 %v506
        %553 = vmatpush.xpose.msra.mxu0 %v503
        %554 = vmatpush.xpose.msra.mxu0 %v500
        %555 = vmatpush.xpose.msra.mxu0 %v497
        %556 = vmatpush.xpose.msra.mxu0 %v494
        %557 = vmatmul.f32.gmra.mxu0 %v491
        %v558 = vpop.f32.mrf.mxu0
        %v559 = vadd.f32 0.0, %v558
        %560 = vdwg.mxu0
        %v562 = vsel %vm489, %v352, 0
        %v565 = vsel %vm489, %v371, 0
        %v568 = vsel %vm489, %v372, 0
        %v571 = vsel %vm489, %v373, 0
        %v574 = vsel %vm489, %v374, 0
        %v577 = vsel %vm489, %v375, 0
        %v580 = vsel %vm489, %v376, 0
        %v583 = vsel %vm489, %v377, 0
        %v586 = vsel %vm489, %v378, 0
        %v589 = vsel %vm489, %v379, 0
        %v592 = vsel %vm489, %v380, 0
        %v595 = vsel %vm489, %v381, 0
        %v598 = vsel %vm489, %v382, 0
        %v601 = vsel %vm489, %v383, 0
        %v604 = vsel %vm489, %v384, 0
        %v607 = vsel %vm489, %v385, 0
        %v610 = vsel %vm489, %v386, 0
        %612 = vmatpush.xpose.msra.mxu0 %v610
        %613 = vmatpush.xpose.msra.mxu0 %v607
        %614 = vmatpush.xpose.msra.mxu0 %v604
        %615 = vmatpush.xpose.msra.mxu0 %v601
        %616 = vmatpush.xpose.msra.mxu0 %v598
        %617 = vmatpush.xpose.msra.mxu0 %v595
        %618 = vmatpush.xpose.msra.mxu0 %v592
        %619 = vmatpush.xpose.msra.mxu0 %v589
        %620 = vmatpush.xpose.msra.mxu0 %v586
        %621 = vmatpush.xpose.msra.mxu0 %v583
        %622 = vmatpush.xpose.msra.mxu0 %v580
        %623 = vmatpush.xpose.msra.mxu0 %v577
        %624 = vmatpush.xpose.msra.mxu0 %v574
        %625 = vmatpush.xpose.msra.mxu0 %v571
        %626 = vmatpush.xpose.msra.mxu0 %v568
        %627 = vmatpush.xpose.msra.mxu0 %v565
        %628 = vmatmul.f32.gmra.mxu0 %v562
        %v629 = vpop.f32.mrf.mxu0
        %v630 = vadd.f32 0.0, %v629
        %631 = vdwg.mxu0
        %v633 = vsel %vm489, %v353, 0
        %v636 = vsel %vm489, %v387, 0
        %v639 = vsel %vm489, %v388, 0
        %v642 = vsel %vm489, %v389, 0
        %v645 = vsel %vm489, %v390, 0
        %v648 = vsel %vm489, %v391, 0
        %v651 = vsel %vm489, %v392, 0
        %v654 = vsel %vm489, %v393, 0
        %v657 = vsel %vm489, %v394, 0
        %v660 = vsel %vm489, %v395, 0
        %v663 = vsel %vm489, %v396, 0
        %v666 = vsel %vm489, %v397, 0
        %v669 = vsel %vm489, %v398, 0
        %v672 = vsel %vm489, %v399, 0
        %v675 = vsel %vm489, %v400, 0
        %v678 = vsel %vm489, %v401, 0
        %v681 = vsel %vm489, %v402, 0
        %683 = vmatpush.xpose.msra.mxu0 %v681
        %684 = vmatpush.xpose.msra.mxu0 %v678
        %685 = vmatpush.xpose.msra.mxu0 %v675
        %686 = vmatpush.xpose.msra.mxu0 %v672
        %687 = vmatpush.xpose.msra.mxu0 %v669
        %688 = vmatpush.xpose.msra.mxu0 %v666
        %689 = vmatpush.xpose.msra.mxu0 %v663
        %690 = vmatpush.xpose.msra.mxu0 %v660
        %691 = vmatpush.xpose.msra.mxu0 %v657
        %692 = vmatpush.xpose.msra.mxu0 %v654
        %693 = vmatpush.xpose.msra.mxu0 %v651
        %694 = vmatpush.xpose.msra.mxu0 %v648
        %695 = vmatpush.xpose.msra.mxu0 %v645
        %696 = vmatpush.xpose.msra.mxu0 %v642
        %697 = vmatpush.xpose.msra.mxu0 %v639
        %698 = vmatpush.xpose.msra.mxu0 %v636
        %699 = vmatmul.f32.gmra.mxu0 %v633
        %v700 = vpop.f32.mrf.mxu0
        %v701 = vadd.f32 0.0, %v700
        %702 = vdwg.mxu0
        %v704 = vsel %vm489, %v354, 0
        %v707 = vsel %vm489, %v403, 0
        %v710 = vsel %vm489, %v404, 0
        %v713 = vsel %vm489, %v405, 0
        %v716 = vsel %vm489, %v406, 0
        %v719 = vsel %vm489, %v407, 0
        %v722 = vsel %vm489, %v408, 0
        %v725 = vsel %vm489, %v409, 0
        %v728 = vsel %vm489, %v410, 0
        %v731 = vsel %vm489, %v411, 0
        %v734 = vsel %vm489, %v412, 0
        %v737 = vsel %vm489, %v413, 0
        %v740 = vsel %vm489, %v414, 0
        %v743 = vsel %vm489, %v415, 0
        %v746 = vsel %vm489, %v416, 0
        %v749 = vsel %vm489, %v417, 0
        %v752 = vsel %vm489, %v418, 0
        %754 = vmatpush.xpose.msra.mxu0 %v752
        %755 = vmatpush.xpose.msra.mxu0 %v749
        %756 = vmatpush.xpose.msra.mxu0 %v746
        %757 = vmatpush.xpose.msra.mxu0 %v743
        %758 = vmatpush.xpose.msra.mxu0 %v740
        %759 = vmatpush.xpose.msra.mxu0 %v737
        %760 = vmatpush.xpose.msra.mxu0 %v734
        %761 = vmatpush.xpose.msra.mxu0 %v731
        %762 = vmatpush.xpose.msra.mxu0 %v728
        %763 = vmatpush.xpose.msra.mxu0 %v725
        %764 = vmatpush.xpose.msra.mxu0 %v722
        %765 = vmatpush.xpose.msra.mxu0 %v719
        %766 = vmatpush.xpose.msra.mxu0 %v716
        %767 = vmatpush.xpose.msra.mxu0 %v713
        %768 = vmatpush.xpose.msra.mxu0 %v710
        %769 = vmatpush.xpose.msra.mxu0 %v707
        %770 = vmatmul.f32.gmra.mxu0 %v704
        %v771 = vpop.f32.mrf.mxu0
        %v772 = vadd.f32 0.0, %v771
        %773 = vdwg.mxu0
        %v774 = vsel %vm488, %v559, -1e+30
        %v775 = vsel %vm488, %v630, -1e+30
        %v776 = vsel %vm488, %v701, -1e+30
        %v777 = vsel %vm488, %v772, -1e+30
        %v778 = vld [vmem:[#allocation2] sm:$0xff]
        %v779 = vld [vmem:[#allocation2 + $0x8] sm:$0xff]
        %v780 = vld [vmem:[#allocation2 + $0x10] sm:$0xff]
        %v781 = vld [vmem:[#allocation2 + $0x18] sm:$0xff]
        %782 = vmax.xlane.f32.xlu0 %v774
        %v783 = vpop.xlane.xlu0 %782
        %784 = vmax.xlane.f32.xlu0 %v775
        %v785 = vpop.xlane.xlu0 %784
        %786 = vmax.xlane.f32.xlu0 %v776
        %v787 = vpop.xlane.xlu0 %786
        %788 = vmax.xlane.f32.xlu0 %v777
        %v789 = vpop.xlane.xlu0 %788
        %v790 = vmax.f32 %v778, %v783
        %v791 = vmax.f32 %v779, %v785
        %v792 = vmax.f32 %v780, %v787
        %v793 = vmax.f32 %v781, %v789
        %v794 = vsub.f32 %v778, %v790
        %v795 = vsub.f32 %v779, %v791
        %v796 = vsub.f32 %v780, %v792
        %v797 = vsub.f32 %v781, %v793
        %v798 = vmul.f32 %v794, 1.442695
        %v799 = vpow.pop %v798
        %v800 = vmul.f32 %v795, 1.442695
        %v801 = vpow.pop %v800
        %v802 = vmul.f32 %v796, 1.442695
        %v803 = vpow.pop %v802
        %v804 = vmul.f32 %v797, 1.442695
        %v805 = vpow.pop %v804
        %807 = vset.pattern.permute.xlu0 0
        %808 = vperm.xlu0 %807, %v790
        %v809 = vpop.permute.xlu0 %808
        %812 = vset.pattern.permute.xlu0 0
        %813 = vperm.xlu0 %812, %v791
        %v814 = vpop.permute.xlu0 %813
        %817 = vset.pattern.permute.xlu0 0
        %818 = vperm.xlu0 %817, %v792
        %v819 = vpop.permute.xlu0 %818
        %822 = vset.pattern.permute.xlu0 0
        %823 = vperm.xlu0 %822, %v793
        %v824 = vpop.permute.xlu0 %823
        %v826 = vsub.f32 %v774, %v809
        %v827 = vsub.f32 %v775, %v814
        %v828 = vsub.f32 %v776, %v819
        %v829 = vsub.f32 %v777, %v824
        %v830 = vmul.f32 %v826, 1.442695
        %v831 = vpow.pop %v830
        %v832 = vmul.f32 %v827, 1.442695
        %v833 = vpow.pop %v832
        %v834 = vmul.f32 %v828, 1.442695
        %v835 = vpow.pop %v834
        %v836 = vmul.f32 %v829, 1.442695
        %v837 = vpow.pop %v836
        %v838 = vld [vmem:[#allocation3] sm:$0xff]
        %v839 = vld [vmem:[#allocation3 + $0x8] sm:$0xff]
        %v840 = vld [vmem:[#allocation3 + $0x10] sm:$0xff]
        %v841 = vld [vmem:[#allocation3 + $0x18] sm:$0xff]
        %v842 = vmul.f32 %v799, %v838
        %v843 = vmul.f32 %v801, %v839
        %v844 = vmul.f32 %v803, %v840
        %v845 = vmul.f32 %v805, %v841
        %846 = vadd.xlane.f32.xlu0 %v831
        %v847 = vpop.xlane.xlu0 %846
        %848 = vadd.xlane.f32.xlu0 %v833
        %v849 = vpop.xlane.xlu0 %848
        %850 = vadd.xlane.f32.xlu0 %v835
        %v851 = vpop.xlane.xlu0 %850
        %852 = vadd.xlane.f32.xlu0 %v837
        %v853 = vpop.xlane.xlu0 %852
        %v854 = vadd.f32 %v842, %v847
        %v855 = vadd.f32 %v843, %v849
        %v856 = vadd.f32 %v844, %v851
        %v857 = vadd.f32 %v845, %v853
        %858 = vmatpush.msra.mxu0 %v434
        %859 = vmatpush.msra.mxu0 %v433
        %860 = vmatpush.msra.mxu0 %v432
        %861 = vmatpush.msra.mxu0 %v431
        %862 = vmatpush.msra.mxu0 %v430
        %863 = vmatpush.msra.mxu0 %v429
        %864 = vmatpush.msra.mxu0 %v428
        %865 = vmatpush.msra.mxu0 %v427
        %866 = vmatpush.msra.mxu0 %v426
        %867 = vmatpush.msra.mxu0 %v425
        %868 = vmatpush.msra.mxu0 %v424
        %869 = vmatpush.msra.mxu0 %v423
        %870 = vmatpush.msra.mxu0 %v422
        %871 = vmatpush.msra.mxu0 %v421
        %872 = vmatpush.msra.mxu0 %v420
        %873 = vmatpush.msra.mxu0 %v419
        %874 = vmatmul.f32.gmra.mxu0 %v831
        %v875 = vpop.f32.mrf.mxu0
        %v876 = vadd.f32 0.0, %v875
        %877 = vdwg.mxu0
        %878 = vmatpush.msra.mxu0 %v450
        %879 = vmatpush.msra.mxu0 %v449
        %880 = vmatpush.msra.mxu0 %v448
        %881 = vmatpush.msra.mxu0 %v447
        %882 = vmatpush.msra.mxu0 %v446
        %883 = vmatpush.msra.mxu0 %v445
        %884 = vmatpush.msra.mxu0 %v444
        %885 = vmatpush.msra.mxu0 %v443
        %886 = vmatpush.msra.mxu0 %v442
        %887 = vmatpush.msra.mxu0 %v441
        %888 = vmatpush.msra.mxu0 %v440
        %889 = vmatpush.msra.mxu0 %v439
        %890 = vmatpush.msra.mxu0 %v438
        %891 = vmatpush.msra.mxu0 %v437
        %892 = vmatpush.msra.mxu0 %v436
        %893 = vmatpush.msra.mxu0 %v435
        %894 = vmatmul.f32.gmra.mxu0 %v833
        %v895 = vpop.f32.mrf.mxu0
        %v896 = vadd.f32 0.0, %v895
        %897 = vdwg.mxu0
        %898 = vmatpush.msra.mxu0 %v466
        %899 = vmatpush.msra.mxu0 %v465
        %900 = vmatpush.msra.mxu0 %v464
        %901 = vmatpush.msra.mxu0 %v463
        %902 = vmatpush.msra.mxu0 %v462
        %903 = vmatpush.msra.mxu0 %v461
        %904 = vmatpush.msra.mxu0 %v460
        %905 = vmatpush.msra.mxu0 %v459
        %906 = vmatpush.msra.mxu0 %v458
        %907 = vmatpush.msra.mxu0 %v457
        %908 = vmatpush.msra.mxu0 %v456
        %909 = vmatpush.msra.mxu0 %v455
        %910 = vmatpush.msra.mxu0 %v454
        %911 = vmatpush.msra.mxu0 %v453
        %912 = vmatpush.msra.mxu0 %v452
        %913 = vmatpush.msra.mxu0 %v451
        %914 = vmatmul.f32.gmra.mxu0 %v835
        %v915 = vpop.f32.mrf.mxu0
        %v916 = vadd.f32 0.0, %v915
        %917 = vdwg.mxu0
        %918 = vmatpush.msra.mxu0 %v482
        %919 = vmatpush.msra.mxu0 %v481
        %920 = vmatpush.msra.mxu0 %v480
        %921 = vmatpush.msra.mxu0 %v479
        %922 = vmatpush.msra.mxu0 %v478
        %923 = vmatpush.msra.mxu0 %v477
        %924 = vmatpush.msra.mxu0 %v476
        %925 = vmatpush.msra.mxu0 %v475
        %926 = vmatpush.msra.mxu0 %v474
        %927 = vmatpush.msra.mxu0 %v473
        %928 = vmatpush.msra.mxu0 %v472
        %929 = vmatpush.msra.mxu0 %v471
        %930 = vmatpush.msra.mxu0 %v470
        %931 = vmatpush.msra.mxu0 %v469
        %932 = vmatpush.msra.mxu0 %v468
        %933 = vmatpush.msra.mxu0 %v467
        %934 = vmatmul.f32.gmra.mxu0 %v837
        %v935 = vpop.f32.mrf.mxu0
        %v936 = vadd.f32 0.0, %v935
        %937 = vdwg.mxu0
        %v938 = vld [vmem:[#allocation4] sm:$0xff]
        %v939 = vld [vmem:[#allocation4 + $0x8] sm:$0xff]
        %v940 = vld [vmem:[#allocation4 + $0x10] sm:$0xff]
        %v941 = vld [vmem:[#allocation4 + $0x18] sm:$0xff]
        %943 = vset.pattern.permute.xlu0 0
        %944 = vperm.xlu0 %943, %v799
        %v945 = vpop.permute.xlu0 %944
        %948 = vset.pattern.permute.xlu0 0
        %949 = vperm.xlu0 %948, %v801
        %v950 = vpop.permute.xlu0 %949
        %953 = vset.pattern.permute.xlu0 0
        %954 = vperm.xlu0 %953, %v803
        %v955 = vpop.permute.xlu0 %954
        %958 = vset.pattern.permute.xlu0 0
        %959 = vperm.xlu0 %958, %v805
        %v960 = vpop.permute.xlu0 %959
        %v962 = vmul.f32 %v945, %v938
        %v963 = vmul.f32 %v950, %v939
        %v964 = vmul.f32 %v955, %v940
        %v965 = vmul.f32 %v960, %v941
        %v966 = vadd.f32 %v962, %v876
        %v967 = vadd.f32 %v963, %v896
        %v968 = vadd.f32 %v964, %v916
        %v969 = vadd.f32 %v965, %v936
        %970 = vst.msk [vmem:[#allocation4] sm:$0xff] %vm489, %v966
        %971 = vst.msk [vmem:[#allocation4 + $0x8] sm:$0xff] %vm489, %v967
        %972 = vst.msk [vmem:[#allocation4 + $0x10] sm:$0xff] %vm489, %v968
        %973 = vst.msk [vmem:[#allocation4 + $0x18] sm:$0xff] %vm489, %v969
        %vm974 = vcmask 7168
        %975 = vst.msk [vmem:[#allocation2] sm:$0xff] %vm974, %v790
        %976 = vst.msk [vmem:[#allocation2 + $0x8] sm:$0xff] %vm974, %v791
        %977 = vst.msk [vmem:[#allocation2 + $0x10] sm:$0xff] %vm974, %v792
        %978 = vst.msk [vmem:[#allocation2 + $0x18] sm:$0xff] %vm974, %v793
        %979 = vst.msk [vmem:[#allocation3] sm:$0xff] %vm974, %v854
        %980 = vst.msk [vmem:[#allocation3 + $0x8] sm:$0xff] %vm974, %v855
        %981 = vst.msk [vmem:[#allocation3 + $0x10] sm:$0xff] %vm974, %v856
        %982 = vst.msk [vmem:[#allocation3 + $0x18] sm:$0xff] %vm974, %v857
        %v983 = vrcp.pop %v854
        %v984 = vrcp.pop %v855
        %v985 = vrcp.pop %v856
        %v986 = vrcp.pop %v857
        %v987 = vmul.f32 %v854, %v983
        %v988 = vmul.f32 %v855, %v984
        %v989 = vmul.f32 %v856, %v985
        %v990 = vmul.f32 %v857, %v986
        %v991 = vsub.f32 2.0, %v987
        %v992 = vsub.f32 2.0, %v988
        %v993 = vsub.f32 2.0, %v989
        %v994 = vsub.f32 2.0, %v990
        %v995 = vmul.f32 %v983, %v991
        %v996 = vmul.f32 %v984, %v992
        %v997 = vmul.f32 %v985, %v993
        %v998 = vmul.f32 %v986, %v994
        %1000 = vset.pattern.permute.xlu0 0
        %1001 = vperm.xlu0 %1000, %v995
        %v1002 = vpop.permute.xlu0 %1001
        %1005 = vset.pattern.permute.xlu0 0
        %1006 = vperm.xlu0 %1005, %v996
        %v1007 = vpop.permute.xlu0 %1006
        %1010 = vset.pattern.permute.xlu0 0
        %1011 = vperm.xlu0 %1010, %v997
        %v1012 = vpop.permute.xlu0 %1011
        %1015 = vset.pattern.permute.xlu0 0
        %1016 = vperm.xlu0 %1015, %v998
        %v1017 = vpop.permute.xlu0 %1016
        %v1019 = vmul.f32 %v831, %v1002
        %v1020 = vmul.f32 %v833, %v1007
        %v1021 = vmul.f32 %v835, %v1012
        %v1022 = vmul.f32 %v837, %v1017
        %1023 = vst [vmem:[%s293] sm:$0xff] %v1019
        %1024 = vst [vmem:[%s293 + $0x8] sm:$0xff] %v1020
        %1025 = vst [vmem:[%s293 + $0x10] sm:$0xff] %v1021
        %1026 = vst [vmem:[%s293 + $0x18] sm:$0xff] %v1022
        // Predicated region
        $region37: #{tpu_custom_call.1} parent=31 // pred_check
          %p1027 = pneg %p329
        $region38: #{tpu_custom_call.1} parent=31 // pred_check_branch
          %1029 = sbr.rel (%p1027) target = $region40
        $region39: #{tpu_custom_call.1} parent=31 // pred_region
          %v1030 = vld [vmem:[#allocation3] sm:$0xff]
          %v1031 = vld [vmem:[#allocation3 + $0x8] sm:$0xff]
          %v1032 = vld [vmem:[#allocation3 + $0x10] sm:$0xff]
          %v1033 = vld [vmem:[#allocation3 + $0x18] sm:$0xff]
          %v1034 = vrcp.pop %v1030
          %v1035 = vrcp.pop %v1031
          %v1036 = vrcp.pop %v1032
          %v1037 = vrcp.pop %v1033
          %v1038 = vmul.f32 %v1030, %v1034
          %v1039 = vmul.f32 %v1031, %v1035
          %v1040 = vmul.f32 %v1032, %v1036
          %v1041 = vmul.f32 %v1033, %v1037
          %v1042 = vsub.f32 2.0, %v1038
          %v1043 = vsub.f32 2.0, %v1039
          %v1044 = vsub.f32 2.0, %v1040
          %v1045 = vsub.f32 2.0, %v1041
          %v1046 = vmul.f32 %v1034, %v1042
          %v1047 = vmul.f32 %v1035, %v1043
          %v1048 = vmul.f32 %v1036, %v1044
          %v1049 = vmul.f32 %v1037, %v1045
          %v1050 = vld [vmem:[#allocation4] sm:$0xff]
          %v1051 = vld [vmem:[#allocation4 + $0x8] sm:$0xff]
          %v1052 = vld [vmem:[#allocation4 + $0x10] sm:$0xff]
          %v1053 = vld [vmem:[#allocation4 + $0x18] sm:$0xff]
          %1055 = vset.pattern.permute.xlu0 0
          %1056 = vperm.xlu0 %1055, %v1046
          %v1057 = vpop.permute.xlu0 %1056
          %1060 = vset.pattern.permute.xlu0 0
          %1061 = vperm.xlu0 %1060, %v1047
          %v1062 = vpop.permute.xlu0 %1061
          %1065 = vset.pattern.permute.xlu0 0
          %1066 = vperm.xlu0 %1065, %v1048
          %v1067 = vpop.permute.xlu0 %1066
          %1070 = vset.pattern.permute.xlu0 0
          %1071 = vperm.xlu0 %1070, %v1049
          %v1072 = vpop.permute.xlu0 %1071
          %v1074 = vmul.f32 %v1050, %v1057
          %v1075 = vmul.f32 %v1051, %v1062
          %v1076 = vmul.f32 %v1052, %v1067
          %v1077 = vmul.f32 %v1053, %v1072
          %1078 = vst.msk [vmem:[%s286] sm:$0xff] %vm489, %v1074
          %1079 = vst.msk [vmem:[%s286 + $0x8] sm:$0xff] %vm489, %v1075
          %1080 = vst.msk [vmem:[%s286 + $0x10] sm:$0xff] %vm489, %v1076
          %1081 = vst.msk [vmem:[%s286 + $0x18] sm:$0xff] %vm489, %v1077
        $region40: #{tpu_custom_call.1} parent=31 // pred_fallthru
          _
        %s1082 = sand.u32 %s135, 1
        %s1083 = scalar_lea.sflag [#allocation6], %s1082
        %s1084 = sand.u32 %s135, 1
        %s1085 = smul.addr %s1084, 32
        %s1086 = scalar_lea.vmem [#allocation5], %s1085
        %s1087 = sand.u32 %s165, 1
        %s1088 = scalar_lea.sflag [#allocation8], %s1087
        %s1089 = sand.u32 %s165, 1
        %s1090 = smul.addr %s1089, 32
        %s1091 = scalar_lea.vmem [#allocation7], %s1090
        // Predicated region
        $region41: #{tpu_custom_call.1} parent=31 // pred_check
          %p1092 = pneg %p145
        $region42: #{tpu_custom_call.1} parent=31 // pred_check_branch
          %1094 = sbr.rel (%p1092) target = $region44
        $region43: #{tpu_custom_call.1} parent=31 // pred_region
          %s1095 = smul.u32 4, %s27
          %1097 = vsyncadd %s1083, 0
          %s1098 = sadd.s32 %s28, %s1095
          %s1099 = smul.addr %s1098, 8
          %s1100 = scalar_lea.hbm %s3, %s1099
          %s1101 = sshll.u32 %s1086, 4
          %s1102 = int_to_ptr.vmem [resolvable:$true] %s1101
          %s1103 = sshll.u32 %s1100, 4
          %s1104 = int_to_ptr.hbm [resolvable:$true] %s1103
          %1109 = dma.vmem_to_hbm [thread:$0]  %s1102, 512, %s1104, %s1083, 128, 128, 8
        $region44: #{tpu_custom_call.1} parent=31 // pred_fallthru
          _
        // Predicated region
        $region45: #{tpu_custom_call.1} parent=31 // pred_check
          %p1110 = pneg %p175
        $region46: #{tpu_custom_call.1} parent=31 // pred_check_branch
          %1112 = sbr.rel (%p1110) target = $region48
        $region47: #{tpu_custom_call.1} parent=31 // pred_region
          %s1113 = smul.u32 4, %s27
          %1115 = vsyncadd %s1088, 0
          %s1116 = sadd.s32 %s29, %s28
          %s1117 = sadd.s32 %s1116, %s1113
          %s1118 = smul.addr %s1117, 8
          %s1119 = scalar_lea.hbm %s4, %s1118
          %s1120 = sshll.u32 %s1091, 4
          %s1121 = int_to_ptr.vmem [resolvable:$true] %s1120
          %s1122 = sshll.u32 %s1119, 4
          %s1123 = int_to_ptr.hbm [resolvable:$true] %s1122
          %1128 = dma.vmem_to_hbm [thread:$0]  %s1121, 512, %s1123, %s1088, 128, 128, 8
        $region48: #{tpu_custom_call.1} parent=31 // pred_fallthru
          _
      $region32: #{tpu_custom_call.1} parent=5 // pred_fallthru
        _
      %p1129 = scmp.le.s32.totalorder 2, %s17
      // Predicated region
      $region49: #{tpu_custom_call.1} parent=5 // pred_check
        %p1130 = pneg %p1129
      $region50: #{tpu_custom_call.1} parent=5 // pred_check_branch
        %1132 = sbr.rel (%p1130) target = $region52
      $region51: #{tpu_custom_call.1} parent=5 // pred_region
        %s1133 = ssub.s32 %s17, 2
        // Predicated region
        $region53: #{tpu_custom_call.1} parent=51 // pred_check
          %p1134 = pneg %p151
        $region54: #{tpu_custom_call.1} parent=51 // pred_check_branch
          %1136 = sbr.rel (%p1134) target = $region56
        $region55: #{tpu_custom_call.1} parent=51 // pred_region
          %s1137 = sand.u32 %s136, 1
          %s1138 = scalar_lea.sflag [#allocation6], %s1137
          %s1139 = sand.u32 %s136, 1
          %s1140 = smul.addr %s1139, 32
          %s1141 = scalar_lea.vmem [#allocation5], %s1140
          %1143 = dma.done %s1138, 512
        $region56: #{tpu_custom_call.1} parent=51 // pred_fallthru
          _
        // Predicated region
        $region57: #{tpu_custom_call.1} parent=51 // pred_check
          %p1144 = pneg %p181
        $region58: #{tpu_custom_call.1} parent=51 // pred_check_branch
          %1146 = sbr.rel (%p1144) target = $region60
        $region59: #{tpu_custom_call.1} parent=51 // pred_region
          %s1147 = sand.u32 %s166, 1
          %s1148 = scalar_lea.sflag [#allocation8], %s1147
          %s1149 = sand.u32 %s166, 1
          %s1150 = smul.addr %s1149, 32
          %s1151 = scalar_lea.vmem [#allocation7], %s1150
          %1153 = dma.done %s1148, 512
        $region60: #{tpu_custom_call.1} parent=51 // pred_fallthru
          _
      $region52: #{tpu_custom_call.1} parent=5 // pred_fallthru
        _
    $region6: #{tpu_custom_call.1} parent=1 // loop_footer
      %s21 = sadd.s32 1, %s17
    $region7: #{tpu_custom_call.1} parent=1 // loop_footer_branch
      %16 = sbr.rel target = $region3
    $region8: #{tpu_custom_call.1} parent=1 // loop_exit
      _
    %1154 = vsyncpa [#allocation6], 1
    %s1155 = scalar_lea.sflag [#allocation6], 1
    %1156 = vsyncpa %s1155, 1
    %1157 = vsyncpa [#allocation8], 1
    %s1158 = scalar_lea.sflag [#allocation8], 1
    %1159 = vsyncpa %s1158, 1

</llo_original>
